<compile_context>
chip_gen: v6e
topology: v6e:2x2x1
jax: 0.10.0
libtpu: 0.0.40
codegen_flags: <defaults>
</compile_context>

<pallas_src>
import jax
import jax.numpy as jnp
from jax import lax
from jax.experimental import pallas as pl
from jax.experimental.pallas import tpu as pltpu

COORDS_WEIGHT = 1.0


def _egcl_kernel(
    # edge-tiled index inputs
    row_ref, col_ref, rowt_ref,                      # (TE,1), (TE,1), (1,TE) int32
    # node-resident inputs
    h_ref, coord_ref,                                # (N,F) f32, (N,3) f32
    # edge_mlp layer 1 (input split: src / tgt / radial) + layer 2
    we1s_ref, we1t_ref, we1r_ref, be1_ref,           # (F,H) bf16, (F,H) bf16, (1,H) f32, (1,H) f32
    we2_ref, be2_ref,                                # (H,H) bf16, (1,H) f32
    # coord_mlp (last layer bias-free, passed transposed as (1,H))
    wc1_ref, bc1_ref, wc2t_ref,                      # (H,H) bf16, (1,H) f32, (1,H) f32
    # node_mlp (input split: h / agg)
    wn1h_ref, wn1a_ref, bn1_ref, wn2_ref, bn2_ref,   # bf16, bf16, f32, bf16, f32
    # outputs
    h_out_ref, coord_out_ref,                        # (N,F), (N,3)
    # scratch (persists across the edge-tile grid)
    hsx_ref, htx_ref,                                # (N,H+3) bf16  [h@We1s|coord], [h@We1t|coord]
    acc_ref,                                         # (N,H+4) f32   [agg | tsum | deg]
):
    f32 = jnp.float32
    bf16 = jnp.bfloat16
    t = pl.program_id(0)
    n_tiles = pl.num_programs(0)
    TE = row_ref.shape[0]
    N = h_ref.shape[0]
    H = we2_ref.shape[0]

    # ---- step 0: zero the fused accumulator, project node feats + stash coord (bf16) ----
    @pl.when(t == 0)
    def _init():
        h_bf = h_ref[...].astype(bf16)
        coord_bf = coord_ref[...].astype(bf16)
        hs = jnp.dot(h_bf, we1s_ref[...], preferred_element_type=f32).astype(bf16)
        ht = jnp.dot(h_bf, we1t_ref[...], preferred_element_type=f32).astype(bf16)
        hsx_ref[...] = jnp.concatenate([hs, coord_bf], axis=1)
        htx_ref[...] = jnp.concatenate([ht, coord_bf], axis=1)
        acc_ref[...] = jnp.zeros_like(acc_ref)

    row = row_ref[...]                                   # (TE,1) int32
    col = col_ref[...]                                   # (TE,1) int32
    rowt = rowt_ref[...]                                 # (1,TE) int32

    # ---- per-tile one-hots, built directly in bf16 (exact for {0,1}) ----
    # Padded edges (idx == N) fall outside the iota range -> all-zero rows/columns.
    lane_n = lax.broadcasted_iota(jnp.int32, (TE, N), 1)     # gather orientation
    g_row = (lane_n == row).astype(bf16)                     # (TE,N)
    g_col = (lane_n == col).astype(bf16)                     # (TE,N)
    sub_n = lax.broadcasted_iota(jnp.int32, (N, TE), 0)      # scatter orientation
    g_rowT = (sub_n == rowt).astype(bf16)                    # (N,TE)

    # ---- fused gather: edge-MLP pre-activation lanes [:H], coord lanes [H:] ----
    gr = jnp.dot(g_row, hsx_ref[...], preferred_element_type=f32)   # (TE, H+3)
    gc = jnp.dot(g_col, htx_ref[...], preferred_element_type=f32)   # (TE, H+3)

    # ---- coord2radial ----
    coord_diff = gr[:, H:] - gc[:, H:]                               # (TE,3)
    radial = jnp.sum(coord_diff * coord_diff, axis=1, keepdims=True)  # (TE,1)

    # ---- edge_model : edge_mlp(cat[h[row], h[col], radial]) ----
    e1 = jnp.maximum(
        gr[:, :H] + gc[:, :H]
        + radial * we1r_ref[...]            # (TE,1)*(1,H) == radial @ W_r
        + be1_ref[...], 0.0)
    edge_feat = jnp.maximum(
        jnp.dot(e1.astype(bf16), we2_ref[...], preferred_element_type=f32) + be2_ref[...],
        0.0)                                                          # (TE,H)
    ef_bf = edge_feat.astype(bf16)

    # ---- coord_model MLP : Linear->ReLU->Linear(H,1,no bias) (last layer as VPU mul + lane reduce) ----
    c1 = jnp.maximum(
        jnp.dot(ef_bf, wc1_ref[...], preferred_element_type=f32) + bc1_ref[...], 0.0)
    scal = jnp.sum(c1 * wc2t_ref[...], axis=1, keepdims=True)         # (TE,1)
    trans = coord_diff * scal                                         # (TE,3)

    # ---- fused scatter: one (N,TE)x(TE,H+4) MXU pass accumulates [agg | tsum | deg] ----
    packed = jnp.concatenate(
        [ef_bf, trans.astype(bf16), jnp.ones((TE, 1), bf16)], axis=1)  # (TE, H+4)
    acc_ref[...] += jnp.dot(g_rowT, packed, preferred_element_type=f32)

    # ---- last step: finalize coord_model (segment mean) and node_model (recurrent) ----
    @pl.when(t == n_tiles - 1)
    def _finalize():
        agg = acc_ref[:, :H]                                  # (N,H)
        tsum = acc_ref[:, H:H + 3]                            # (N,3)
        deg = jnp.maximum(acc_ref[:, H + 3:H + 4], 1.0)       # (N,1)
        coord_out_ref[...] = coord_ref[...] + (tsum / deg) * COORDS_WEIGHT

        h = h_ref[...]
        n1 = jnp.maximum(
            jnp.dot(h.astype(jnp.bfloat16), wn1h_ref[...], preferred_element_type=f32)
            + jnp.dot(agg.astype(jnp.bfloat16), wn1a_ref[...], preferred_element_type=f32)
            + bn1_ref[...], 0.0)
        h_out_ref[...] = (h
                          + jnp.dot(n1.astype(jnp.bfloat16), wn2_ref[...],
                                    preferred_element_type=f32)
                          + bn2_ref[...])


def _round_up(x, m):
    return ((x + m - 1) // m) * m


def _pick_tile_and_vmem():
    """Per-generation defaults: smaller tile + tighter limit on 64-MiB (v7x) parts."""
    vmem_cap = 128 * 1024 * 1024
    try:
        vmem_cap = int(pltpu.get_tpu_info().vmem_capacity_bytes)
    except Exception:
        pass
    if vmem_cap <= 64 * 1024 * 1024:        # v7x-class
        return 256, 48 * 1024 * 1024
    return 512, 64 * 1024 * 1024            # v5e / v6e (128 MiB physical)


def e_gcl_forward(params, h, coord, row, col, *, max_tile_e=None, vmem_limit_bytes=None):
    """Runs the E_GCL forward pass with an edge-tiled Pallas TPU kernel."""
    te_default, vmem_default = _pick_tile_and_vmem()
    if max_tile_e is None:
        max_tile_e = te_default
    if vmem_limit_bytes is None:
        vmem_limit_bytes = vmem_default
    assert max_tile_e % 128 == 0

    f32 = jnp.float32
    bf16 = jnp.bfloat16
    h = h.astype(f32)
    coord = coord.astype(f32)
    N, F = h.shape
    H = params["we2"].shape[0]
    E = int(row.shape[0])

    # Tile selection: a single full-width tile for small graphs, otherwise a
    # lane-aligned (multiple-of-128) tile so the (1, TILE_E) index block is legal.
    e8 = _round_up(max(E, 8), 8)
    tile_e = e8 if e8 <= max_tile_e else max_tile_e
    num_tiles = max(1, -(-E // tile_e))
    e_pad = num_tiles * tile_e
    pad = e_pad - E

    # Pad with sentinel index N (out of range -> all-zero one-hot -> no contribution).
    row_p = jnp.pad(row.astype(jnp.int32), (0, pad), constant_values=N)
    col_p = jnp.pad(col.astype(jnp.int32), (0, pad), constant_values=N)
    row2 = row_p.reshape(e_pad, 1)
    col2 = col_p.reshape(e_pad, 1)
    rowT = row_p.reshape(1, e_pad)

    inputs = (
        row2, col2, rowT, h, coord,
        params["we1s"].astype(bf16), params["we1t"].astype(bf16),
        params["we1r"].astype(f32), params["be1"].astype(f32),
        params["we2"].astype(bf16), params["be2"].astype(f32),
        params["wc1"].astype(bf16), params["bc1"].astype(f32),
        params["wc2"].reshape(1, H).astype(f32),
        params["wn1h"].astype(bf16), params["wn1a"].astype(bf16),
        params["bn1"].astype(f32), params["wn2"].astype(bf16), params["bn2"].astype(f32),
    )

    def full(a):
        return pl.BlockSpec(a.shape, lambda t, _nd=a.ndim: (0,) * _nd)

    edge_col_spec = pl.BlockSpec((tile_e, 1), lambda t: (t, 0))
    edge_lane_spec = pl.BlockSpec((1, tile_e), lambda t: (0, t))
    in_specs = [edge_col_spec, edge_col_spec, edge_lane_spec] + [full(a) for a in inputs[3:]]
    out_specs = (pl.BlockSpec((N, F), lambda t: (0, 0)),
                 pl.BlockSpec((N, 3), lambda t: (0, 0)))

    # Advisory cost estimate for XLA scheduling around the custom call.
    def _nbytes(x):
        return int(x.size) * int(x.dtype.itemsize)
    bytes_accessed = sum(_nbytes(x) for x in inputs) + N * (F + 3) * 4
    flops = int(
        2 * N * F * H * 2                       # hs / ht node projections
        + 2 * e_pad * N * (H + 3) * 2           # fused gathers (feat + coord)
        + 2 * e_pad * H * H * 2                 # edge-MLP layer 2 + coord-MLP layer 1
        + e_pad * (8 * H + 12)                  # radial, adds/relu, scal reduce, trans
        + 2 * N * e_pad * (H + 4)               # fused scatter (agg | tsum | deg)
        + 2 * N * (F * H + H * H + H * F)       # node MLP
    )

    h_out, coord_out = pl.pallas_call(
        _egcl_kernel,
        out_shape=(jax.ShapeDtypeStruct((N, F), f32),
                   jax.ShapeDtypeStruct((N, 3), f32)),
        grid_spec=pltpu.PrefetchScalarGridSpec(
            num_scalar_prefetch=0,
            grid=(num_tiles,),
            in_specs=in_specs,
            out_specs=out_specs,
            scratch_shapes=[
                pltpu.VMEM((N, H + 3), bf16),   # hsx = [h@We1s | coord]
                pltpu.VMEM((N, H + 3), bf16),   # htx = [h@We1t | coord]
                pltpu.VMEM((N, H + 4), f32),    # acc = [agg | tsum | deg]
            ]),
        compiler_params=pltpu.CompilerParams(
            dimension_semantics=("arbitrary",),
            vmem_limit_bytes=int(vmem_limit_bytes)),
        cost_estimate=pl.CostEstimate(
            flops=flops, transcendentals=0, bytes_accessed=int(bytes_accessed)),
    )(*inputs)
    return h_out, coord_out


def init_params(key, input_nf, hidden_nf, output_nf):
    ks = jax.random.split(key, 16)
    n = lambda k, s, sc: (jax.random.normal(k, s, jnp.float32) * sc)
    return {
        # edge_mlp: Linear(2*F+1, H) -> ReLU -> Linear(H, H) -> ReLU
        "we1s": n(ks[0], (input_nf, hidden_nf), 0.1),
        "we1t": n(ks[1], (input_nf, hidden_nf), 0.1),
        "we1r": n(ks[2], (1, hidden_nf), 0.1),
        "be1": n(ks[3], (1, hidden_nf), 0.01),
        "we2": n(ks[4], (hidden_nf, hidden_nf), 0.1),
        "be2": n(ks[5], (1, hidden_nf), 0.01),
        # node_mlp: Linear(H+F, H) -> ReLU -> Linear(H, F_out)
        "wn1h": n(ks[6], (input_nf, hidden_nf), 0.1),
        "wn1a": n(ks[7], (hidden_nf, hidden_nf), 0.1),
        "bn1": n(ks[8], (1, hidden_nf), 0.01),
        "wn2": n(ks[9], (hidden_nf, output_nf), 0.1),
        "bn2": n(ks[10], (1, output_nf), 0.01),
        # coord_mlp: Linear(H, H) -> ReLU -> Linear(H, 1, bias=False) (xavier gain 1e-3)
        "wc1": n(ks[11], (hidden_nf, hidden_nf), 0.1),
        "bc1": n(ks[12], (1, hidden_nf), 0.01),
        "wc2": n(ks[13], (hidden_nf, 1), 0.001),
    }


def e_gcl_reference(params, h, coord, row, col):
    """Pure-JAX reference mirroring the PyTorch forward."""
    hp = lax.Precision.HIGHEST
    relu = lambda x: jnp.maximum(x, 0.0)
    N, F = h.shape
    coord_diff = coord[row] - coord[col]
    radial = jnp.sum(coord_diff ** 2, axis=1, keepdims=True)
    we1 = jnp.concatenate([params["we1s"], params["we1t"], params["we1r"]], axis=0)
    e_in = jnp.concatenate([h[row], h[col], radial], axis=1)
    e1 = relu(jnp.dot(e_in, we1, precision=hp) + params["be1"])
    edge_feat = relu(jnp.dot(e1, params["we2"], precision=hp) + params["be2"])
    # coord model
    c1 = relu(jnp.dot(edge_feat, params["wc1"], precision=hp) + params["bc1"])
    trans = coord_diff * jnp.dot(c1, params["wc2"], precision=hp)
    s = jnp.zeros((N, 3), jnp.float32).at[row].add(trans)
    c = jnp.zeros((N, 3), jnp.float32).at[row].add(jnp.ones_like(trans))
    coord_out = coord + (s / jnp.maximum(c, 1.0)) * COORDS_WEIGHT
    # node model
    agg = jnp.zeros((N, edge_feat.shape[1]), jnp.float32).at[row].add(edge_feat)
    wn1 = jnp.concatenate([params["wn1h"], params["wn1a"]], axis=0)
    n1 = relu(jnp.dot(jnp.concatenate([h, agg], axis=1), wn1, precision=hp) + params["bn1"])
    h_out = h + jnp.dot(n1, params["wn2"], precision=hp) + params["bn2"]
    return h_out, coord_out


if __name__ == "__main__":
    key = jax.random.PRNGKey(0)
    N, F, H = 8, 32, 32            # nodes, input_nf=output_nf, hidden_nf
    k_h, k_c, k_p = jax.random.split(key, 3)
    h = jax.random.normal(k_h, (N, F), jnp.float32)
    coord = jax.random.normal(k_c, (N, 3), jnp.float32)

    # fully-connected edge_index without self-loops: E = N*(N-1) = 56
    rows, cols = [], []
    for i in range(N):
        for j in range(N):
            if i != j:
                rows.append(i)
                cols.append(j)
    row = jnp.array(rows, dtype=jnp.int32)
    col = jnp.array(cols, dtype=jnp.int32)

    params = init_params(k_p, F, H, F)

    h_out, coord_out = e_gcl_forward(params, h, coord, row, col)
    jax.block_until_ready((h_out, coord_out))

    h_ref, coord_ref = e_gcl_reference(params, h, coord, row, col)
    assert jnp.allclose(h_out, h_ref, rtol=1e-2, atol=1e-2), \
        f"h mismatch: max err {jnp.max(jnp.abs(h_out - h_ref))}"
    assert jnp.allclose(coord_out, coord_ref, rtol=1e-2, atol=1e-2), \
        f"coord mismatch: max err {jnp.max(jnp.abs(coord_out - coord_ref))}"

    print("KERNEL_OK")
</pallas_src>

<mosaic_0001>
module attributes {stable_mosaic.version = 11 : i64} {
  func.func @_egcl_kernel(%arg0: i32, %arg1: memref<56x1xi32, #tpu.memory_space<vmem>>, %arg2: memref<56x1xi32, #tpu.memory_space<vmem>>, %arg3: memref<1x56xi32, #tpu.memory_space<vmem>>, %arg4: memref<8x32xf32, #tpu.memory_space<vmem>>, %arg5: memref<8x3xf32, #tpu.memory_space<vmem>>, %arg6: memref<32x32xbf16, #tpu.memory_space<vmem>>, %arg7: memref<32x32xbf16, #tpu.memory_space<vmem>>, %arg8: memref<1x32xf32, #tpu.memory_space<vmem>>, %arg9: memref<1x32xf32, #tpu.memory_space<vmem>>, %arg10: memref<32x32xbf16, #tpu.memory_space<vmem>>, %arg11: memref<1x32xf32, #tpu.memory_space<vmem>>, %arg12: memref<32x32xbf16, #tpu.memory_space<vmem>>, %arg13: memref<1x32xf32, #tpu.memory_space<vmem>>, %arg14: memref<1x32xf32, #tpu.memory_space<vmem>>, %arg15: memref<32x32xbf16, #tpu.memory_space<vmem>>, %arg16: memref<32x32xbf16, #tpu.memory_space<vmem>>, %arg17: memref<1x32xf32, #tpu.memory_space<vmem>>, %arg18: memref<32x32xbf16, #tpu.memory_space<vmem>>, %arg19: memref<1x32xf32, #tpu.memory_space<vmem>>, %arg20: memref<8x32xf32, #tpu.memory_space<vmem>>, %arg21: memref<8x3xf32, #tpu.memory_space<vmem>>, %arg22: memref<8x35xbf16, #tpu.memory_space<vmem>>, %arg23: memref<8x35xbf16, #tpu.memory_space<vmem>>, %arg24: memref<8x36xf32, #tpu.memory_space<vmem>>) attributes {dimension_semantics = [#tpu.dimension_semantics<arbitrary>], iteration_bounds = array<i64: 1>, scalar_prefetch = 0 : i64, scratch_operands = 3 : i64, tpu.core_type = #tpu.core_type<tc>, window_params = [{transform_indices = @transform_0, window_bounds = array<i64: 56, 1>}, {transform_indices = @transform_1, window_bounds = array<i64: 56, 1>}, {transform_indices = @transform_2, window_bounds = array<i64: 1, 56>}, {pipeline_mode = #tpu.pipeline_mode<synchronous>, transform_indices = @transform_3, window_bounds = array<i64: 8, 32>}, {pipeline_mode = #tpu.pipeline_mode<synchronous>, transform_indices = @transform_4, window_bounds = array<i64: 8, 3>}, {pipeline_mode = #tpu.pipeline_mode<synchronous>, transform_indices = @transform_5, window_bounds = array<i64: 32, 32>}, {pipeline_mode = #tpu.pipeline_mode<synchronous>, transform_indices = @transform_6, window_bounds = array<i64: 32, 32>}, {pipeline_mode = #tpu.pipeline_mode<synchronous>, transform_indices = @transform_7, window_bounds = array<i64: 1, 32>}, {pipeline_mode = #tpu.pipeline_mode<synchronous>, transform_indices = @transform_8, window_bounds = array<i64: 1, 32>}, {pipeline_mode = #tpu.pipeline_mode<synchronous>, transform_indices = @transform_9, window_bounds = array<i64: 32, 32>}, {pipeline_mode = #tpu.pipeline_mode<synchronous>, transform_indices = @transform_10, window_bounds = array<i64: 1, 32>}, {pipeline_mode = #tpu.pipeline_mode<synchronous>, transform_indices = @transform_11, window_bounds = array<i64: 32, 32>}, {pipeline_mode = #tpu.pipeline_mode<synchronous>, transform_indices = @transform_12, window_bounds = array<i64: 1, 32>}, {pipeline_mode = #tpu.pipeline_mode<synchronous>, transform_indices = @transform_13, window_bounds = array<i64: 1, 32>}, {pipeline_mode = #tpu.pipeline_mode<synchronous>, transform_indices = @transform_14, window_bounds = array<i64: 32, 32>}, {pipeline_mode = #tpu.pipeline_mode<synchronous>, transform_indices = @transform_15, window_bounds = array<i64: 32, 32>}, {pipeline_mode = #tpu.pipeline_mode<synchronous>, transform_indices = @transform_16, window_bounds = array<i64: 1, 32>}, {pipeline_mode = #tpu.pipeline_mode<synchronous>, transform_indices = @transform_17, window_bounds = array<i64: 32, 32>}, {pipeline_mode = #tpu.pipeline_mode<synchronous>, transform_indices = @transform_18, window_bounds = array<i64: 1, 32>}, {pipeline_mode = #tpu.pipeline_mode<synchronous>, transform_indices = @transform_19, window_bounds = array<i64: 8, 32>}, {pipeline_mode = #tpu.pipeline_mode<synchronous>, transform_indices = @transform_20, window_bounds = array<i64: 8, 3>}]} {
    %c0_i32 = arith.constant 0 : i32
    %0 = arith.cmpi eq, %arg0, %c0_i32 : i32
    %1 = arith.extui %0 : i1 to i32
    %c0_i32_0 = arith.constant 0 : i32
    %2 = arith.cmpi ne, %1, %c0_i32_0 : i32
    scf.if %2 {
      %c0_40 = arith.constant 0 : index
      %c0_41 = arith.constant 0 : index
      %79 = vector.load %arg4[%c0_40, %c0_41] : memref<8x32xf32, #tpu.memory_space<vmem>>, vector<8x32xf32>
      %80 = arith.truncf %79 : vector<8x32xf32> to vector<8x32xbf16>
      %c0_42 = arith.constant 0 : index
      %c0_43 = arith.constant 0 : index
      %81 = vector.load %arg5[%c0_42, %c0_43] : memref<8x3xf32, #tpu.memory_space<vmem>>, vector<8x3xf32>
      %82 = arith.truncf %81 : vector<8x3xf32> to vector<8x3xbf16>
      %c0_44 = arith.constant 0 : index
      %c0_45 = arith.constant 0 : index
      %83 = vector.load %arg6[%c0_44, %c0_45] : memref<32x32xbf16, #tpu.memory_space<vmem>>, vector<32x32xbf16>
      %cst_46 = arith.constant dense<0.000000e+00> : vector<8x32xf32>
      %84 = tpu.matmul %80, %83, %cst_46 {dimension_numbers = #tpu.dot_dimension_numbers<[1], [0], [0], [1], [0, 0, 1, 1], [], []>} : vector<8x32xbf16>, vector<32x32xbf16>, vector<8x32xf32> -> vector<8x32xf32>
      %85 = arith.truncf %84 : vector<8x32xf32> to vector<8x32xbf16>
      %c0_47 = arith.constant 0 : index
      %c0_48 = arith.constant 0 : index
      %86 = vector.load %arg7[%c0_47, %c0_48] : memref<32x32xbf16, #tpu.memory_space<vmem>>, vector<32x32xbf16>
      %cst_49 = arith.constant dense<0.000000e+00> : vector<8x32xf32>
      %87 = tpu.matmul %80, %86, %cst_49 {dimension_numbers = #tpu.dot_dimension_numbers<[1], [0], [0], [1], [0, 0, 1, 1], [], []>} : vector<8x32xbf16>, vector<32x32xbf16>, vector<8x32xf32> -> vector<8x32xf32>
      %88 = arith.truncf %87 : vector<8x32xf32> to vector<8x32xbf16>
      %89 = tpu.concatenate %85, %82 in 1 : vector<8x32xbf16>, vector<8x3xbf16> -> vector<8x35xbf16>
      %c0_50 = arith.constant 0 : index
      %c0_51 = arith.constant 0 : index
      %90 = vector.load %arg22[%c0_50, %c0_51] : memref<8x35xbf16, #tpu.memory_space<vmem>>, vector<8x35xbf16>
      tpu.vector_store %arg22[%c0_50, %c0_51], %89 {strides = array<i32>} : memref<8x35xbf16, #tpu.memory_space<vmem>>, vector<8x35xbf16>,
      %91 = tpu.concatenate %88, %82 in 1 : vector<8x32xbf16>, vector<8x3xbf16> -> vector<8x35xbf16>
      %c0_52 = arith.constant 0 : index
      %c0_53 = arith.constant 0 : index
      %92 = vector.load %arg23[%c0_52, %c0_53] : memref<8x35xbf16, #tpu.memory_space<vmem>>, vector<8x35xbf16>
      tpu.vector_store %arg23[%c0_52, %c0_53], %91 {strides = array<i32>} : memref<8x35xbf16, #tpu.memory_space<vmem>>, vector<8x35xbf16>,
      %cst_54 = arith.constant 0.000000e+00 : f32
      %93 = vector.broadcast %cst_54 : f32 to vector<8x36xf32>
      %c0_55 = arith.constant 0 : index
      %c0_56 = arith.constant 0 : index
      %94 = vector.load %arg24[%c0_55, %c0_56] : memref<8x36xf32, #tpu.memory_space<vmem>>, vector<8x36xf32>
      tpu.vector_store %arg24[%c0_55, %c0_56], %93 {strides = array<i32>} : memref<8x36xf32, #tpu.memory_space<vmem>>, vector<8x36xf32>,
    } else {
    }
    %c0 = arith.constant 0 : index
    %c0_1 = arith.constant 0 : index
    %3 = vector.load %arg1[%c0, %c0_1] : memref<56x1xi32, #tpu.memory_space<vmem>>, vector<56x1xi32>
    %c0_2 = arith.constant 0 : index
    %c0_3 = arith.constant 0 : index
    %4 = vector.load %arg2[%c0_2, %c0_3] : memref<56x1xi32, #tpu.memory_space<vmem>>, vector<56x1xi32>
    %c0_4 = arith.constant 0 : index
    %c0_5 = arith.constant 0 : index
    %5 = vector.load %arg3[%c0_4, %c0_5] : memref<1x56xi32, #tpu.memory_space<vmem>>, vector<1x56xi32>
    %6 = tpu.iota {dimensions = array<i32: 1>} : vector<56x8xi32>
    %7 = vector.broadcast %3 : vector<56x1xi32> to vector<56x8xi32>
    %8 = arith.cmpi eq, %6, %7 : vector<56x8xi32>
    %9 = arith.extui %8 : vector<56x8xi1> to vector<56x8xi32>
    %10 = arith.sitofp %9 : vector<56x8xi32> to vector<56x8xf32>
    %11 = arith.truncf %10 : vector<56x8xf32> to vector<56x8xbf16>
    %12 = vector.broadcast %4 : vector<56x1xi32> to vector<56x8xi32>
    %13 = arith.cmpi eq, %6, %12 : vector<56x8xi32>
    %14 = arith.extui %13 : vector<56x8xi1> to vector<56x8xi32>
    %15 = arith.sitofp %14 : vector<56x8xi32> to vector<56x8xf32>
    %16 = arith.truncf %15 : vector<56x8xf32> to vector<56x8xbf16>
    %17 = tpu.iota {dimensions = array<i32: 0>} : vector<8x56xi32>
    %18 = vector.broadcast %5 : vector<1x56xi32> to vector<8x56xi32>
    %19 = arith.cmpi eq, %17, %18 : vector<8x56xi32>
    %20 = arith.extui %19 : vector<8x56xi1> to vector<8x56xi32>
    %21 = arith.sitofp %20 : vector<8x56xi32> to vector<8x56xf32>
    %22 = arith.truncf %21 : vector<8x56xf32> to vector<8x56xbf16>
    %c0_6 = arith.constant 0 : index
    %c0_7 = arith.constant 0 : index
    %23 = vector.load %arg22[%c0_6, %c0_7] : memref<8x35xbf16, #tpu.memory_space<vmem>>, vector<8x35xbf16>
    %cst = arith.constant dense<0.000000e+00> : vector<56x35xf32>
    %24 = tpu.matmul %11, %23, %cst {dimension_numbers = #tpu.dot_dimension_numbers<[1], [0], [0], [1], [0, 0, 1, 1], [], []>} : vector<56x8xbf16>, vector<8x35xbf16>, vector<56x35xf32> -> vector<56x35xf32>
    %c0_8 = arith.constant 0 : index
    %c0_9 = arith.constant 0 : index
    %25 = vector.load %arg23[%c0_8, %c0_9] : memref<8x35xbf16, #tpu.memory_space<vmem>>, vector<8x35xbf16>
    %cst_10 = arith.constant dense<0.000000e+00> : vector<56x35xf32>
    %26 = tpu.matmul %16, %25, %cst_10 {dimension_numbers = #tpu.dot_dimension_numbers<[1], [0], [0], [1], [0, 0, 1, 1], [], []>} : vector<56x8xbf16>, vector<8x35xbf16>, vector<56x35xf32> -> vector<56x35xf32>
    %27 = vector.extract_strided_slice %24 {offsets = [0, 32], sizes = [56, 3], strides = [1, 1]} : vector<56x35xf32> to vector<56x3xf32>
    %28 = vector.extract_strided_slice %26 {offsets = [0, 32], sizes = [56, 3], strides = [1, 1]} : vector<56x35xf32> to vector<56x3xf32>
    %29 = arith.subf %27, %28 : vector<56x3xf32>
    %30 = arith.mulf %29, %29 : vector<56x3xf32>
    %cst_11 = arith.constant dense<0.000000e+00> : vector<56xf32>
    %31 = vector.multi_reduction <add>, %30, %cst_11 [1] : vector<56x3xf32> to vector<56xf32>
    %32 = vector.shape_cast %31 : vector<56xf32> to vector<56x1xf32>
    %33 = vector.extract_strided_slice %24 {offsets = [0, 0], sizes = [56, 32], strides = [1, 1]} : vector<56x35xf32> to vector<56x32xf32>
    %34 = vector.extract_strided_slice %26 {offsets = [0, 0], sizes = [56, 32], strides = [1, 1]} : vector<56x35xf32> to vector<56x32xf32>
    %35 = arith.addf %33, %34 : vector<56x32xf32>
    %c0_12 = arith.constant 0 : index
    %c0_13 = arith.constant 0 : index
    %36 = vector.load %arg8[%c0_12, %c0_13] : memref<1x32xf32, #tpu.memory_space<vmem>>, vector<1x32xf32>
    %37 = vector.broadcast %32 : vector<56x1xf32> to vector<56x32xf32>
    %38 = vector.broadcast %36 : vector<1x32xf32> to vector<56x32xf32>
    %39 = arith.mulf %37, %38 : vector<56x32xf32>
    %40 = arith.addf %35, %39 : vector<56x32xf32>
    %c0_14 = arith.constant 0 : index
    %c0_15 = arith.constant 0 : index
    %41 = vector.load %arg9[%c0_14, %c0_15] : memref<1x32xf32, #tpu.memory_space<vmem>>, vector<1x32xf32>
    %42 = vector.broadcast %41 : vector<1x32xf32> to vector<56x32xf32>
    %43 = arith.addf %40, %42 : vector<56x32xf32>
    %cst_16 = arith.constant 0.000000e+00 : f32
    %44 = vector.broadcast %cst_16 : f32 to vector<56x32xf32>
    %45 = arith.maximumf %43, %44 : vector<56x32xf32>
    %46 = arith.truncf %45 : vector<56x32xf32> to vector<56x32xbf16>
    %c0_17 = arith.constant 0 : index
    %c0_18 = arith.constant 0 : index
    %47 = vector.load %arg10[%c0_17, %c0_18] : memref<32x32xbf16, #tpu.memory_space<vmem>>, vector<32x32xbf16>
    %cst_19 = arith.constant dense<0.000000e+00> : vector<56x32xf32>
    %48 = tpu.matmul %46, %47, %cst_19 {dimension_numbers = #tpu.dot_dimension_numbers<[1], [0], [0], [1], [0, 0, 1, 1], [], []>} : vector<56x32xbf16>, vector<32x32xbf16>, vector<56x32xf32> -> vector<56x32xf32>
    %c0_20 = arith.constant 0 : index
    %c0_21 = arith.constant 0 : index
    %49 = vector.load %arg11[%c0_20, %c0_21] : memref<1x32xf32, #tpu.memory_space<vmem>>, vector<1x32xf32>
    %50 = vector.broadcast %49 : vector<1x32xf32> to vector<56x32xf32>
    %51 = arith.addf %48, %50 : vector<56x32xf32>
    %cst_22 = arith.constant 0.000000e+00 : f32
    %52 = vector.broadcast %cst_22 : f32 to vector<56x32xf32>
    %53 = arith.maximumf %51, %52 : vector<56x32xf32>
    %54 = arith.truncf %53 : vector<56x32xf32> to vector<56x32xbf16>
    %c0_23 = arith.constant 0 : index
    %c0_24 = arith.constant 0 : index
    %55 = vector.load %arg12[%c0_23, %c0_24] : memref<32x32xbf16, #tpu.memory_space<vmem>>, vector<32x32xbf16>
    %cst_25 = arith.constant dense<0.000000e+00> : vector<56x32xf32>
    %56 = tpu.matmul %54, %55, %cst_25 {dimension_numbers = #tpu.dot_dimension_numbers<[1], [0], [0], [1], [0, 0, 1, 1], [], []>} : vector<56x32xbf16>, vector<32x32xbf16>, vector<56x32xf32> -> vector<56x32xf32>
    %c0_26 = arith.constant 0 : index
    %c0_27 = arith.constant 0 : index
    %57 = vector.load %arg13[%c0_26, %c0_27] : memref<1x32xf32, #tpu.memory_space<vmem>>, vector<1x32xf32>
    %58 = vector.broadcast %57 : vector<1x32xf32> to vector<56x32xf32>
    %59 = arith.addf %56, %58 : vector<56x32xf32>
    %cst_28 = arith.constant 0.000000e+00 : f32
    %60 = vector.broadcast %cst_28 : f32 to vector<56x32xf32>
    %61 = arith.maximumf %59, %60 : vector<56x32xf32>
    %c0_29 = arith.constant 0 : index
    %c0_30 = arith.constant 0 : index
    %62 = vector.load %arg14[%c0_29, %c0_30] : memref<1x32xf32, #tpu.memory_space<vmem>>, vector<1x32xf32>
    %63 = vector.broadcast %62 : vector<1x32xf32> to vector<56x32xf32>
    %64 = arith.mulf %61, %63 : vector<56x32xf32>
    %cst_31 = arith.constant dense<0.000000e+00> : vector<56xf32>
    %65 = vector.multi_reduction <add>, %64, %cst_31 [1] : vector<56x32xf32> to vector<56xf32>
    %66 = vector.shape_cast %65 : vector<56xf32> to vector<56x1xf32>
    %67 = vector.broadcast %66 : vector<56x1xf32> to vector<56x3xf32>
    %68 = arith.mulf %29, %67 : vector<56x3xf32>
    %69 = arith.truncf %68 : vector<56x3xf32> to vector<56x3xbf16>
    %cst_32 = arith.constant 1.000000e+00 : bf16
    %70 = vector.broadcast %cst_32 : bf16 to vector<56x1xbf16>
    %71 = tpu.concatenate %54, %69, %70 in 1 : vector<56x32xbf16>, vector<56x3xbf16>, vector<56x1xbf16> -> vector<56x36xbf16>
    %c0_33 = arith.constant 0 : index
    %c0_34 = arith.constant 0 : index
    %72 = vector.load %arg24[%c0_33, %c0_34] : memref<8x36xf32, #tpu.memory_space<vmem>>, vector<8x36xf32>
    %cst_35 = arith.constant dense<0.000000e+00> : vector<8x36xf32>
    %73 = tpu.matmul %22, %71, %cst_35 {dimension_numbers = #tpu.dot_dimension_numbers<[1], [0], [0], [1], [0, 0, 1, 1], [], []>} : vector<8x56xbf16>, vector<56x36xbf16>, vector<8x36xf32> -> vector<8x36xf32>
    %74 = arith.addf %72, %73 : vector<8x36xf32>
    %c0_36 = arith.constant 0 : index
    %c0_37 = arith.constant 0 : index
    %75 = vector.load %arg24[%c0_36, %c0_37] : memref<8x36xf32, #tpu.memory_space<vmem>>, vector<8x36xf32>
    tpu.vector_store %arg24[%c0_36, %c0_37], %74 {strides = array<i32>} : memref<8x36xf32, #tpu.memory_space<vmem>>, vector<8x36xf32>,
    %c0_i32_38 = arith.constant 0 : i32
    %76 = arith.cmpi eq, %arg0, %c0_i32_38 : i32
    %77 = arith.extui %76 : i1 to i32
    %c0_i32_39 = arith.constant 0 : i32
    %78 = arith.cmpi ne, %77, %c0_i32_39 : i32
    scf.if %78 {
      %c0_40 = arith.constant 0 : index
      %c0_41 = arith.constant 0 : index
      %79 = vector.load %arg24[%c0_40, %c0_41] : memref<8x36xf32, #tpu.memory_space<vmem>>, vector<8x32xf32>
      %c0_42 = arith.constant 0 : index
      %c32 = arith.constant 32 : index
      %80 = vector.load %arg24[%c0_42, %c32] : memref<8x36xf32, #tpu.memory_space<vmem>>, vector<8x3xf32>
      %c0_43 = arith.constant 0 : index
      %c35 = arith.constant 35 : index
      %81 = vector.load %arg24[%c0_43, %c35] : memref<8x36xf32, #tpu.memory_space<vmem>>, vector<8x1xf32>
      %cst_44 = arith.constant 1.000000e+00 : f32
      %82 = vector.broadcast %cst_44 : f32 to vector<8x1xf32>
      %83 = arith.maximumf %81, %82 : vector<8x1xf32>
      %c0_45 = arith.constant 0 : index
      %c0_46 = arith.constant 0 : index
      %84 = vector.load %arg5[%c0_45, %c0_46] : memref<8x3xf32, #tpu.memory_space<vmem>>, vector<8x3xf32>
      %85 = vector.broadcast %83 : vector<8x1xf32> to vector<8x3xf32>
      %86 = arith.divf %80, %85 : vector<8x3xf32>
      %cst_47 = arith.constant 1.000000e+00 : f32
      %87 = vector.broadcast %cst_47 : f32 to vector<8x3xf32>
      %88 = arith.mulf %86, %87 : vector<8x3xf32>
      %89 = arith.addf %84, %88 : vector<8x3xf32>
      %c0_48 = arith.constant 0 : index
      %c0_49 = arith.constant 0 : index
      %90 = vector.load %arg21[%c0_48, %c0_49] : memref<8x3xf32, #tpu.memory_space<vmem>>, vector<8x3xf32>
      tpu.vector_store %arg21[%c0_48, %c0_49], %89 {strides = array<i32>} : memref<8x3xf32, #tpu.memory_space<vmem>>, vector<8x3xf32>,
      %c0_50 = arith.constant 0 : index
      %c0_51 = arith.constant 0 : index
      %91 = vector.load %arg4[%c0_50, %c0_51] : memref<8x32xf32, #tpu.memory_space<vmem>>, vector<8x32xf32>
      %92 = arith.truncf %91 : vector<8x32xf32> to vector<8x32xbf16>
      %c0_52 = arith.constant 0 : index
      %c0_53 = arith.constant 0 : index
      %93 = vector.load %arg15[%c0_52, %c0_53] : memref<32x32xbf16, #tpu.memory_space<vmem>>, vector<32x32xbf16>
      %cst_54 = arith.constant dense<0.000000e+00> : vector<8x32xf32>
      %94 = tpu.matmul %92, %93, %cst_54 {dimension_numbers = #tpu.dot_dimension_numbers<[1], [0], [0], [1], [0, 0, 1, 1], [], []>} : vector<8x32xbf16>, vector<32x32xbf16>, vector<8x32xf32> -> vector<8x32xf32>
      %95 = arith.truncf %79 : vector<8x32xf32> to vector<8x32xbf16>
      %c0_55 = arith.constant 0 : index
      %c0_56 = arith.constant 0 : index
      %96 = vector.load %arg16[%c0_55, %c0_56] : memref<32x32xbf16, #tpu.memory_space<vmem>>, vector<32x32xbf16>
      %cst_57 = arith.constant dense<0.000000e+00> : vector<8x32xf32>
      %97 = tpu.matmul %95, %96, %cst_57 {dimension_numbers = #tpu.dot_dimension_numbers<[1], [0], [0], [1], [0, 0, 1, 1], [], []>} : vector<8x32xbf16>, vector<32x32xbf16>, vector<8x32xf32> -> vector<8x32xf32>
      %98 = arith.addf %94, %97 : vector<8x32xf32>
      %c0_58 = arith.constant 0 : index
      %c0_59 = arith.constant 0 : index
      %99 = vector.load %arg17[%c0_58, %c0_59] : memref<1x32xf32, #tpu.memory_space<vmem>>, vector<1x32xf32>
      %100 = vector.broadcast %99 : vector<1x32xf32> to vector<8x32xf32>
      %101 = arith.addf %98, %100 : vector<8x32xf32>
      %cst_60 = arith.constant 0.000000e+00 : f32
      %102 = vector.broadcast %cst_60 : f32 to vector<8x32xf32>
      %103 = arith.maximumf %101, %102 : vector<8x32xf32>
      %104 = arith.truncf %103 : vector<8x32xf32> to vector<8x32xbf16>
      %c0_61 = arith.constant 0 : index
      %c0_62 = arith.constant 0 : index
      %105 = vector.load %arg18[%c0_61, %c0_62] : memref<32x32xbf16, #tpu.memory_space<vmem>>, vector<32x32xbf16>
      %cst_63 = arith.constant dense<0.000000e+00> : vector<8x32xf32>
      %106 = tpu.matmul %104, %105, %cst_63 {dimension_numbers = #tpu.dot_dimension_numbers<[1], [0], [0], [1], [0, 0, 1, 1], [], []>} : vector<8x32xbf16>, vector<32x32xbf16>, vector<8x32xf32> -> vector<8x32xf32>
      %107 = arith.addf %91, %106 : vector<8x32xf32>
      %c0_64 = arith.constant 0 : index
      %c0_65 = arith.constant 0 : index
      %108 = vector.load %arg19[%c0_64, %c0_65] : memref<1x32xf32, #tpu.memory_space<vmem>>, vector<1x32xf32>
      %109 = vector.broadcast %108 : vector<1x32xf32> to vector<8x32xf32>
      %110 = arith.addf %107, %109 : vector<8x32xf32>
      %c0_66 = arith.constant 0 : index
      %c0_67 = arith.constant 0 : index
      %111 = vector.load %arg20[%c0_66, %c0_67] : memref<8x32xf32, #tpu.memory_space<vmem>>, vector<8x32xf32>
      tpu.vector_store %arg20[%c0_66, %c0_67], %110 {strides = array<i32>} : memref<8x32xf32, #tpu.memory_space<vmem>>, vector<8x32xf32>,
    } else {
    }
    return
  }
  func.func @transform_0(%arg0: i32) -> (i32, i32) {
    %c0_i32 = arith.constant 0 : i32
    %c0_i32_0 = arith.constant 0 : i32
    return %arg0, %c0_i32 : i32, i32
  }
  func.func @transform_1(%arg0: i32) -> (i32, i32) {
    %c0_i32 = arith.constant 0 : i32
    %c0_i32_0 = arith.constant 0 : i32
    return %arg0, %c0_i32 : i32, i32
  }
  func.func @transform_2(%arg0: i32) -> (i32, i32) {
    %c0_i32 = arith.constant 0 : i32
    %c0_i32_0 = arith.constant 0 : i32
    return %c0_i32, %arg0 : i32, i32
  }
  func.func @transform_3(%arg0: i32) -> (i32, i32) {
    %c0_i32 = arith.constant 0 : i32
    %c0_i32_0 = arith.constant 0 : i32
    %c0_i32_1 = arith.constant 0 : i32
    return %c0_i32, %c0_i32_0 : i32, i32
  }
  func.func @transform_4(%arg0: i32) -> (i32, i32) {
    %c0_i32 = arith.constant 0 : i32
    %c0_i32_0 = arith.constant 0 : i32
    %c0_i32_1 = arith.constant 0 : i32
    return %c0_i32, %c0_i32_0 : i32, i32
  }
  func.func @transform_5(%arg0: i32) -> (i32, i32) {
    %c0_i32 = arith.constant 0 : i32
    %c0_i32_0 = arith.constant 0 : i32
    %c0_i32_1 = arith.constant 0 : i32
    return %c0_i32, %c0_i32_0 : i32, i32
  }
  func.func @transform_6(%arg0: i32) -> (i32, i32) {
    %c0_i32 = arith.constant 0 : i32
    %c0_i32_0 = arith.constant 0 : i32
    %c0_i32_1 = arith.constant 0 : i32
    return %c0_i32, %c0_i32_0 : i32, i32
  }
  func.func @transform_7(%arg0: i32) -> (i32, i32) {
    %c0_i32 = arith.constant 0 : i32
    %c0_i32_0 = arith.constant 0 : i32
    %c0_i32_1 = arith.constant 0 : i32
    return %c0_i32, %c0_i32_0 : i32, i32
  }
  func.func @transform_8(%arg0: i32) -> (i32, i32) {
    %c0_i32 = arith.constant 0 : i32
    %c0_i32_0 = arith.constant 0 : i32
    %c0_i32_1 = arith.constant 0 : i32
    return %c0_i32, %c0_i32_0 : i32, i32
  }
  func.func @transform_9(%arg0: i32) -> (i32, i32) {
    %c0_i32 = arith.constant 0 : i32
    %c0_i32_0 = arith.constant 0 : i32
    %c0_i32_1 = arith.constant 0 : i32
    return %c0_i32, %c0_i32_0 : i32, i32
  }
  func.func @transform_10(%arg0: i32) -> (i32, i32) {
    %c0_i32 = arith.constant 0 : i32
    %c0_i32_0 = arith.constant 0 : i32
    %c0_i32_1 = arith.constant 0 : i32
    return %c0_i32, %c0_i32_0 : i32, i32
  }
  func.func @transform_11(%arg0: i32) -> (i32, i32) {
    %c0_i32 = arith.constant 0 : i32
    %c0_i32_0 = arith.constant 0 : i32
    %c0_i32_1 = arith.constant 0 : i32
    return %c0_i32, %c0_i32_0 : i32, i32
  }
  func.func @transform_12(%arg0: i32) -> (i32, i32) {
    %c0_i32 = arith.constant 0 : i32
    %c0_i32_0 = arith.constant 0 : i32
    %c0_i32_1 = arith.constant 0 : i32
    return %c0_i32, %c0_i32_0 : i32, i32
  }
  func.func @transform_13(%arg0: i32) -> (i32, i32) {
    %c0_i32 = arith.constant 0 : i32
    %c0_i32_0 = arith.constant 0 : i32
    %c0_i32_1 = arith.constant 0 : i32
    return %c0_i32, %c0_i32_0 : i32, i32
  }
  func.func @transform_14(%arg0: i32) -> (i32, i32) {
    %c0_i32 = arith.constant 0 : i32
    %c0_i32_0 = arith.constant 0 : i32
    %c0_i32_1 = arith.constant 0 : i32
    return %c0_i32, %c0_i32_0 : i32, i32
  }
  func.func @transform_15(%arg0: i32) -> (i32, i32) {
    %c0_i32 = arith.constant 0 : i32
    %c0_i32_0 = arith.constant 0 : i32
    %c0_i32_1 = arith.constant 0 : i32
    return %c0_i32, %c0_i32_0 : i32, i32
  }
  func.func @transform_16(%arg0: i32) -> (i32, i32) {
    %c0_i32 = arith.constant 0 : i32
    %c0_i32_0 = arith.constant 0 : i32
    %c0_i32_1 = arith.constant 0 : i32
    return %c0_i32, %c0_i32_0 : i32, i32
  }
  func.func @transform_17(%arg0: i32) -> (i32, i32) {
    %c0_i32 = arith.constant 0 : i32
    %c0_i32_0 = arith.constant 0 : i32
    %c0_i32_1 = arith.constant 0 : i32
    return %c0_i32, %c0_i32_0 : i32, i32
  }
  func.func @transform_18(%arg0: i32) -> (i32, i32) {
    %c0_i32 = arith.constant 0 : i32
    %c0_i32_0 = arith.constant 0 : i32
    %c0_i32_1 = arith.constant 0 : i32
    return %c0_i32, %c0_i32_0 : i32, i32
  }
  func.func @transform_19(%arg0: i32) -> (i32, i32) {
    %c0_i32 = arith.constant 0 : i32
    %c0_i32_0 = arith.constant 0 : i32
    %c0_i32_1 = arith.constant 0 : i32
    return %c0_i32, %c0_i32_0 : i32, i32
  }
  func.func @transform_20(%arg0: i32) -> (i32, i32) {
    %c0_i32 = arith.constant 0 : i32
    %c0_i32_0 = arith.constant 0 : i32
    %c0_i32_1 = arith.constant 0 : i32
    return %c0_i32, %c0_i32_0 : i32, i32
  }
}

</mosaic_0001>

<llo_original>
// kernel: tpu_custom_call.1
$region0: #{tpu_custom_call.1}
  #allocation0 [shape = 'u32[]', space=smem, size = 0x4, offset = 0x4, fixed_abs, tag = 'smem constant byte address 0x4 - core index']
  #allocation1 [shape = 'u32[144,128]{1,0:T(1,128)}', space=vmem, size = 0x12000, scoped, tag = 'internal scratch']
  #allocation2 [shape = 'bf16[8,35]{1,0:T(8,128)(2,1)}', space=vmem, size = 0x800, scoped, tag = 'scratch operand']
  #allocation3 [shape = 'bf16[8,35]{1,0:T(8,128)(2,1)}', space=vmem, size = 0x800, scoped, tag = 'scratch operand']
  #allocation4 [shape = 'f32[8,36]{1,0:T(8,128)}', space=vmem, size = 0x1000, scoped, tag = 'scratch operand']
  %s0 = inlined_call_operand.vmem [shape: s32[56,1], index: 0, kind: input, shape index: {}]
  %s1 = inlined_call_operand.vmem [shape: s32[56,1], index: 1, kind: input, shape index: {}]
  %s2 = inlined_call_operand.vmem [shape: s32[1,56], index: 2, kind: input, shape index: {}]
  %s3 = inlined_call_operand.vmem [shape: f32[8,32], index: 3, kind: input, shape index: {}]
  %s4 = inlined_call_operand.vmem [shape: f32[8,3], index: 4, kind: input, shape index: {}]
  %s5 = inlined_call_operand.vmem [shape: bf16[32,32], index: 5, kind: input, shape index: {}]
  %s6 = inlined_call_operand.vmem [shape: bf16[32,32], index: 6, kind: input, shape index: {}]
  %s7 = inlined_call_operand.vmem [shape: f32[1,32], index: 7, kind: input, shape index: {}]
  %s8 = inlined_call_operand.vmem [shape: f32[1,32], index: 8, kind: input, shape index: {}]
  %s9 = inlined_call_operand.vmem [shape: bf16[32,32], index: 9, kind: input, shape index: {}]
  %s10 = inlined_call_operand.vmem [shape: f32[1,32], index: 10, kind: input, shape index: {}]
  %s11 = inlined_call_operand.vmem [shape: bf16[32,32], index: 11, kind: input, shape index: {}]
  %s12 = inlined_call_operand.vmem [shape: f32[1,32], index: 12, kind: input, shape index: {}]
  %s13 = inlined_call_operand.vmem [shape: f32[1,32], index: 13, kind: input, shape index: {}]
  %s14 = inlined_call_operand.vmem [shape: bf16[32,32], index: 14, kind: input, shape index: {}]
  %s15 = inlined_call_operand.vmem [shape: bf16[32,32], index: 15, kind: input, shape index: {}]
  %s16 = inlined_call_operand.vmem [shape: f32[1,32], index: 16, kind: input, shape index: {}]
  %s17 = inlined_call_operand.vmem [shape: bf16[32,32], index: 17, kind: input, shape index: {}]
  %s18 = inlined_call_operand.vmem [shape: f32[1,32], index: 18, kind: input, shape index: {}]
  %s19 = inlined_call_operand.hbm [shape: f32[8,32], index: 19, kind: output, shape index: {0}]
  %s20 = inlined_call_operand.vmem [shape: f32[8,3], index: 20, kind: output, shape index: {1}]
  %21 = xla_tuple %s19, %s20
  %s22 = sld [smem:[#allocation0]]
  $region102: #{tpu_custom_call.1} parent=0
    _
  %s24 = ssub.s32 1, %s22
  %s25 = scalar_select 0, %s24, %s22
  $region1: #{tpu_custom_call.1} parent=0
    #allocation5 [shape = 'u8[4096]{0}', space=vmem, size = 0x1000, scoped, tag = 'output window, operand 0, single buffered']
    #allocation6 [shape = 's32[1]{0}', space=sflag, size = 0x4, scoped, tag = 'scoped memory for tpu_custom_call.1']
    %26 = vsyncpa [#allocation6], 0
    // Predicated region
    $region2: #{tpu_custom_call.1} parent=1 // pred_check
      _
    $region3: #{tpu_custom_call.1} parent=1 // pred_check_branch
      %28 = sbr.rel (0) target = $region5
    $region4: #{tpu_custom_call.1} parent=1 // pred_region
      _
    $region5: #{tpu_custom_call.1} parent=1 // pred_fallthru
      _
    // Predicated region
    $region6: #{tpu_custom_call.1} parent=1 // pred_check
      _
    $region7: #{tpu_custom_call.1} parent=1 // pred_check_branch
      %30 = sbr.rel (0) target = $region9
    $region8: #{tpu_custom_call.1} parent=1 // pred_region
      _
    $region9: #{tpu_custom_call.1} parent=1 // pred_fallthru
      _
    // Predicated region
    $region10: #{tpu_custom_call.1} parent=1 // pred_check
      _
    $region11: #{tpu_custom_call.1} parent=1 // pred_check_branch
      %32 = sbr.rel (0) target = $region13
    $region12: #{tpu_custom_call.1} parent=1 // pred_region
      _
    $region13: #{tpu_custom_call.1} parent=1 // pred_fallthru
      _
    // Predicated region
    $region14: #{tpu_custom_call.1} parent=1 // pred_check
      _
    $region15: #{tpu_custom_call.1} parent=1 // pred_check_branch
      %34 = sbr.rel (0) target = $region17
    $region16: #{tpu_custom_call.1} parent=1 // pred_region
      _
    $region17: #{tpu_custom_call.1} parent=1 // pred_fallthru
      _
    // Predicated region
    $region18: #{tpu_custom_call.1} parent=1 // pred_check
      _
    $region19: #{tpu_custom_call.1} parent=1 // pred_check_branch
      %36 = sbr.rel (0) target = $region21
    $region20: #{tpu_custom_call.1} parent=1 // pred_region
      _
    $region21: #{tpu_custom_call.1} parent=1 // pred_fallthru
      _
    // Predicated region
    $region22: #{tpu_custom_call.1} parent=1 // pred_check
      _
    $region23: #{tpu_custom_call.1} parent=1 // pred_check_branch
      %38 = sbr.rel (0) target = $region25
    $region24: #{tpu_custom_call.1} parent=1 // pred_region
      _
    $region25: #{tpu_custom_call.1} parent=1 // pred_fallthru
      _
    // Predicated region
    $region26: #{tpu_custom_call.1} parent=1 // pred_check
      _
    $region27: #{tpu_custom_call.1} parent=1 // pred_check_branch
      %40 = sbr.rel (0) target = $region29
    $region28: #{tpu_custom_call.1} parent=1 // pred_region
      _
    $region29: #{tpu_custom_call.1} parent=1 // pred_fallthru
      _
    // Predicated region
    $region30: #{tpu_custom_call.1} parent=1 // pred_check
      _
    $region31: #{tpu_custom_call.1} parent=1 // pred_check_branch
      %42 = sbr.rel (0) target = $region33
    $region32: #{tpu_custom_call.1} parent=1 // pred_region
      _
    $region33: #{tpu_custom_call.1} parent=1 // pred_fallthru
      _
    // Predicated region
    $region34: #{tpu_custom_call.1} parent=1 // pred_check
      _
    $region35: #{tpu_custom_call.1} parent=1 // pred_check_branch
      %44 = sbr.rel (0) target = $region37
    $region36: #{tpu_custom_call.1} parent=1 // pred_region
      _
    $region37: #{tpu_custom_call.1} parent=1 // pred_fallthru
      _
    // Predicated region
    $region38: #{tpu_custom_call.1} parent=1 // pred_check
      _
    $region39: #{tpu_custom_call.1} parent=1 // pred_check_branch
      %46 = sbr.rel (0) target = $region41
    $region40: #{tpu_custom_call.1} parent=1 // pred_region
      _
    $region41: #{tpu_custom_call.1} parent=1 // pred_fallthru
      _
    // Predicated region
    $region42: #{tpu_custom_call.1} parent=1 // pred_check
      _
    $region43: #{tpu_custom_call.1} parent=1 // pred_check_branch
      %48 = sbr.rel (0) target = $region45
    $region44: #{tpu_custom_call.1} parent=1 // pred_region
      _
    $region45: #{tpu_custom_call.1} parent=1 // pred_fallthru
      _
    // Predicated region
    $region46: #{tpu_custom_call.1} parent=1 // pred_check
      _
    $region47: #{tpu_custom_call.1} parent=1 // pred_check_branch
      %50 = sbr.rel (0) target = $region49
    $region48: #{tpu_custom_call.1} parent=1 // pred_region
      _
    $region49: #{tpu_custom_call.1} parent=1 // pred_fallthru
      _
    // Predicated region
    $region50: #{tpu_custom_call.1} parent=1 // pred_check
      _
    $region51: #{tpu_custom_call.1} parent=1 // pred_check_branch
      %52 = sbr.rel (0) target = $region53
    $region52: #{tpu_custom_call.1} parent=1 // pred_region
      _
    $region53: #{tpu_custom_call.1} parent=1 // pred_fallthru
      _
    // Predicated region
    $region54: #{tpu_custom_call.1} parent=1 // pred_check
      _
    $region55: #{tpu_custom_call.1} parent=1 // pred_check_branch
      %54 = sbr.rel (0) target = $region57
    $region56: #{tpu_custom_call.1} parent=1 // pred_region
      _
    $region57: #{tpu_custom_call.1} parent=1 // pred_fallthru
      _
    // Predicated region
    $region58: #{tpu_custom_call.1} parent=1 // pred_check
      _
    $region59: #{tpu_custom_call.1} parent=1 // pred_check_branch
      %56 = sbr.rel (0) target = $region61
    $region60: #{tpu_custom_call.1} parent=1 // pred_region
      _
    $region61: #{tpu_custom_call.1} parent=1 // pred_fallthru
      _
    // Predicated region
    $region62: #{tpu_custom_call.1} parent=1 // pred_check
      _
    $region63: #{tpu_custom_call.1} parent=1 // pred_check_branch
      %58 = sbr.rel (0) target = $region65
    $region64: #{tpu_custom_call.1} parent=1 // pred_region
      _
    $region65: #{tpu_custom_call.1} parent=1 // pred_fallthru
      _
    // Predicated region
    $region66: #{tpu_custom_call.1} parent=1 // pred_check
      _
    $region67: #{tpu_custom_call.1} parent=1 // pred_check_branch
      %60 = sbr.rel (0) target = $region69
    $region68: #{tpu_custom_call.1} parent=1 // pred_region
      _
    $region69: #{tpu_custom_call.1} parent=1 // pred_fallthru
      _
    // Predicated region
    $region70: #{tpu_custom_call.1} parent=1 // pred_check
      _
    $region71: #{tpu_custom_call.1} parent=1 // pred_check_branch
      %62 = sbr.rel (0) target = $region73
    $region72: #{tpu_custom_call.1} parent=1 // pred_region
      _
    $region73: #{tpu_custom_call.1} parent=1 // pred_fallthru
      _
    // Predicated region
    $region74: #{tpu_custom_call.1} parent=1 // pred_check
      _
    $region75: #{tpu_custom_call.1} parent=1 // pred_check_branch
      %64 = sbr.rel (0) target = $region77
    $region76: #{tpu_custom_call.1} parent=1 // pred_region
      _
    $region77: #{tpu_custom_call.1} parent=1 // pred_fallthru
      _
    %p67 = scmp.eq.s32.totalorder 0, 0
    // Predicated region
    $region78: #{tpu_custom_call.1} parent=1 // pred_check
      %p68 = pneg %p67
    $region79: #{tpu_custom_call.1} parent=1 // pred_check_branch
      %70 = sbr.rel (%p68) target = $region81
    $region80: #{tpu_custom_call.1} parent=1 // pred_region
      %v71 = vld [vmem:[%s3] sm:$0xff]
      %v72 = vpack.c.bf16 %v71, %v71
      %v73 = vld [vmem:[%s4] sm:$0xff]
      %v74 = vpack.c.bf16 %v73, %v73
      %v75 = vld [vmem:[%s5] sm:$0xf]
      %v76 = vld [vmem:[%s5 + $0x4] sm:$0xf]
      %v77 = vld [vmem:[%s5 + $0x8] sm:$0xf]
      %v78 = vld [vmem:[%s5 + $0xc] sm:$0xf]
      %v83 = vunpack.c.l.b16 %v75
      %v84 = vunpack.c.l.b16 %v76
      %v85 = vunpack.c.l.b16 %v77
      %v86 = vunpack.c.l.b16 %v78
      %v87 = vpack.c.b16 %v84, %v83
      %v88 = vpack.c.b16 %v86, %v85
      %vm91 = vcmask 261120
      %v93 = vsel %vm91, %v72, 0
      %95 = vmatprep.subr.bf16.mxu0 0
      %96 = vmatpush1.bf16.msra.mxu0 0
      %97 = vmatprep.subr.bf16.mxu0 0
      %98 = vmatpush1.bf16.msra.mxu0 0
      %99 = vmatprep.subr.bf16.mxu0 0
      %100 = vmatpush1.bf16.msra.mxu0 0
      %101 = vmatprep.subr.bf16.mxu0 0
      %102 = vmatpush1.bf16.msra.mxu0 0
      %103 = vmatprep.subr.bf16.mxu0 0
      %104 = vmatpush1.bf16.msra.mxu0 0
      %105 = vmatprep.subr.bf16.mxu0 0
      %106 = vmatpush1.bf16.msra.mxu0 0
      %107 = vmatprep.subr.bf16.mxu0 0
      %108 = vmatpush1.bf16.msra.mxu0 %v88
      %109 = vmatprep.subr.bf16.mxu0 0
      %110 = vmatpush1.bf16.msra.mxu0 %v87
      %111 = vmatprep.subr.bf16.mxu0 0
      %112 = vmatpush2.bf16.msra.mxu0 0
      %113 = vmatprep.subr.bf16.mxu0 0
      %114 = vmatpush2.bf16.msra.mxu0 0
      %115 = vmatprep.subr.bf16.mxu0 0
      %116 = vmatpush2.bf16.msra.mxu0 0
      %117 = vmatprep.subr.bf16.mxu0 0
      %118 = vmatpush2.bf16.msra.mxu0 0
      %119 = vmatprep.subr.bf16.mxu0 0
      %120 = vmatpush2.bf16.msra.mxu0 0
      %121 = vmatprep.subr.bf16.mxu0 0
      %122 = vmatpush2.bf16.msra.mxu0 0
      %123 = vmatprep.subr.bf16.mxu0 0
      %124 = vmatpush2.bf16.msra.mxu0 0
      %125 = vmatprep.subr.bf16.mxu0 0
      %126 = vmatpush2.bf16.msra.mxu0 0
      %127 = vmatprep.mubr.bf16.mxu0 0
      %128 = vmatmul.mubr.bf16.gmra.mxu0 %v93
      %v129 = vpop.f32.mrf.mxu0
      %v130 = vadd.f32 0.0, %v129
      %v131 = vpop.f32.mrf.mxu0
      %v132 = vpop.f32.mrf.mxu0
      %v133 = vpop.f32.mrf.mxu0
      %134 = vdwg.mxu0
      %v135 = vpack.c.bf16 %v130, %v130
      %v136 = vld [vmem:[%s6] sm:$0xf]
      %v137 = vld [vmem:[%s6 + $0x4] sm:$0xf]
      %v138 = vld [vmem:[%s6 + $0x8] sm:$0xf]
      %v139 = vld [vmem:[%s6 + $0xc] sm:$0xf]
      %v144 = vunpack.c.l.b16 %v136
      %v145 = vunpack.c.l.b16 %v137
      %v146 = vunpack.c.l.b16 %v138
      %v147 = vunpack.c.l.b16 %v139
      %v148 = vpack.c.b16 %v145, %v144
      %v149 = vpack.c.b16 %v147, %v146
      %152 = vmatprep.subr.bf16.mxu0 0
      %153 = vmatpush1.bf16.msra.mxu0 0
      %154 = vmatprep.subr.bf16.mxu0 0
      %155 = vmatpush1.bf16.msra.mxu0 0
      %156 = vmatprep.subr.bf16.mxu0 0
      %157 = vmatpush1.bf16.msra.mxu0 0
      %158 = vmatprep.subr.bf16.mxu0 0
      %159 = vmatpush1.bf16.msra.mxu0 0
      %160 = vmatprep.subr.bf16.mxu0 0
      %161 = vmatpush1.bf16.msra.mxu0 0
      %162 = vmatprep.subr.bf16.mxu0 0
      %163 = vmatpush1.bf16.msra.mxu0 0
      %164 = vmatprep.subr.bf16.mxu0 0
      %165 = vmatpush1.bf16.msra.mxu0 %v149
      %166 = vmatprep.subr.bf16.mxu0 0
      %167 = vmatpush1.bf16.msra.mxu0 %v148
      %168 = vmatprep.subr.bf16.mxu0 0
      %169 = vmatpush2.bf16.msra.mxu0 0
      %170 = vmatprep.subr.bf16.mxu0 0
      %171 = vmatpush2.bf16.msra.mxu0 0
      %172 = vmatprep.subr.bf16.mxu0 0
      %173 = vmatpush2.bf16.msra.mxu0 0
      %174 = vmatprep.subr.bf16.mxu0 0
      %175 = vmatpush2.bf16.msra.mxu0 0
      %176 = vmatprep.subr.bf16.mxu0 0
      %177 = vmatpush2.bf16.msra.mxu0 0
      %178 = vmatprep.subr.bf16.mxu0 0
      %179 = vmatpush2.bf16.msra.mxu0 0
      %180 = vmatprep.subr.bf16.mxu0 0
      %181 = vmatpush2.bf16.msra.mxu0 0
      %182 = vmatprep.subr.bf16.mxu0 0
      %183 = vmatpush2.bf16.msra.mxu0 0
      %184 = vmatprep.mubr.bf16.mxu0 0
      %185 = vmatmul.mubr.bf16.gmra.mxu0 %v93
      %v186 = vpop.f32.mrf.mxu0
      %v187 = vadd.f32 0.0, %v186
      %v188 = vpop.f32.mrf.mxu0
      %v189 = vpop.f32.mrf.mxu0
      %v190 = vpop.f32.mrf.mxu0
      %191 = vdwg.mxu0
      %v192 = vpack.c.bf16 %v187, %v187
      %194 = vrot.lane.b32.xlu0 %v74, 32
      %v195 = vpop.permute.xlu0 %194
      %v198 = vsel %vm91, %v135, %v195
      %vm200 = vcmask 281600
      %201 = vst.msk [vmem:[#allocation2] sm:$0xf] %vm200, %v198
      %v203 = vsel %vm91, %v192, %v195
      %205 = vst.msk [vmem:[#allocation3] sm:$0xf] %vm200, %v203
      %vm206 = vcmask 293888
      %207 = vst.msk [vmem:[#allocation4] sm:$0xff] %vm206, 0.0
    $region81: #{tpu_custom_call.1} parent=1 // pred_fallthru
      _
    %v208 = vld [vmem:[%s0] sm:$0xff]
    %v209 = vld [vmem:[%s0 + $0x8] sm:$0xff]
    %v210 = vld [vmem:[%s0 + $0x10] sm:$0xff]
    %v211 = vld [vmem:[%s0 + $0x18] sm:$0xff]
    %v212 = vld [vmem:[%s0 + $0x20] sm:$0xff]
    %v213 = vld [vmem:[%s0 + $0x28] sm:$0xff]
    %v214 = vld [vmem:[%s0 + $0x30] sm:$0xff]
    %v215 = vld [vmem:[%s1] sm:$0xff]
    %v216 = vld [vmem:[%s1 + $0x8] sm:$0xff]
    %v217 = vld [vmem:[%s1 + $0x10] sm:$0xff]
    %v218 = vld [vmem:[%s1 + $0x18] sm:$0xff]
    %v219 = vld [vmem:[%s1 + $0x20] sm:$0xff]
    %v220 = vld [vmem:[%s1 + $0x28] sm:$0xff]
    %v221 = vld [vmem:[%s1 + $0x30] sm:$0xff]
    %v222 = vld [vmem:[%s2] sm:$0x1]
    %v223 = vlaneseq
    %v224 = vand.u32 %v223, 127
    %225 = vset.pattern.permute.xlu0 0
    %226 = vperm.xlu0 %225, %v208
    %v227 = vpop.permute.xlu0 %226
    %228 = vset.pattern.permute.xlu0 0
    %229 = vperm.xlu0 %228, %v209
    %v230 = vpop.permute.xlu0 %229
    %231 = vset.pattern.permute.xlu0 0
    %232 = vperm.xlu0 %231, %v210
    %v233 = vpop.permute.xlu0 %232
    %234 = vset.pattern.permute.xlu0 0
    %235 = vperm.xlu0 %234, %v211
    %v236 = vpop.permute.xlu0 %235
    %237 = vset.pattern.permute.xlu0 0
    %238 = vperm.xlu0 %237, %v212
    %v239 = vpop.permute.xlu0 %238
    %240 = vset.pattern.permute.xlu0 0
    %241 = vperm.xlu0 %240, %v213
    %v242 = vpop.permute.xlu0 %241
    %243 = vset.pattern.permute.xlu0 0
    %244 = vperm.xlu0 %243, %v214
    %v245 = vpop.permute.xlu0 %244
    %vm246 = vcmp.eq.s32.totalorder %v224, %v227
    %vm247 = vcmp.eq.s32.totalorder %v224, %v230
    %vm248 = vcmp.eq.s32.totalorder %v224, %v233
    %vm249 = vcmp.eq.s32.totalorder %v224, %v236
    %vm250 = vcmp.eq.s32.totalorder %v224, %v239
    %vm251 = vcmp.eq.s32.totalorder %v224, %v242
    %vm252 = vcmp.eq.s32.totalorder %v224, %v245
    %v253 = vsel %vm246, 1, 0
    %v254 = vsel %vm247, 1, 0
    %v255 = vsel %vm248, 1, 0
    %v256 = vsel %vm249, 1, 0
    %v257 = vsel %vm250, 1, 0
    %v258 = vsel %vm251, 1, 0
    %v259 = vsel %vm252, 1, 0
    %v260 = vcvt.s32.f32 %v253
    %v261 = vcvt.s32.f32 %v254
    %v262 = vcvt.s32.f32 %v255
    %v263 = vcvt.s32.f32 %v256
    %v264 = vcvt.s32.f32 %v257
    %v265 = vcvt.s32.f32 %v258
    %v266 = vcvt.s32.f32 %v259
    %v267 = vpack.c.bf16 %v261, %v260
    %v268 = vpack.c.bf16 %v263, %v262
    %v269 = vpack.c.bf16 %v265, %v264
    %v270 = vpack.c.bf16 %v266, %v266
    %271 = vset.pattern.permute.xlu0 0
    %272 = vperm.xlu0 %271, %v215
    %v273 = vpop.permute.xlu0 %272
    %274 = vset.pattern.permute.xlu0 0
    %275 = vperm.xlu0 %274, %v216
    %v276 = vpop.permute.xlu0 %275
    %277 = vset.pattern.permute.xlu0 0
    %278 = vperm.xlu0 %277, %v217
    %v279 = vpop.permute.xlu0 %278
    %280 = vset.pattern.permute.xlu0 0
    %281 = vperm.xlu0 %280, %v218
    %v282 = vpop.permute.xlu0 %281
    %283 = vset.pattern.permute.xlu0 0
    %284 = vperm.xlu0 %283, %v219
    %v285 = vpop.permute.xlu0 %284
    %286 = vset.pattern.permute.xlu0 0
    %287 = vperm.xlu0 %286, %v220
    %v288 = vpop.permute.xlu0 %287
    %289 = vset.pattern.permute.xlu0 0
    %290 = vperm.xlu0 %289, %v221
    %v291 = vpop.permute.xlu0 %290
    %vm292 = vcmp.eq.s32.totalorder %v224, %v273
    %vm293 = vcmp.eq.s32.totalorder %v224, %v276
    %vm294 = vcmp.eq.s32.totalorder %v224, %v279
    %vm295 = vcmp.eq.s32.totalorder %v224, %v282
    %vm296 = vcmp.eq.s32.totalorder %v224, %v285
    %vm297 = vcmp.eq.s32.totalorder %v224, %v288
    %vm298 = vcmp.eq.s32.totalorder %v224, %v291
    %v299 = vsel %vm292, 1, 0
    %v300 = vsel %vm293, 1, 0
    %v301 = vsel %vm294, 1, 0
    %v302 = vsel %vm295, 1, 0
    %v303 = vsel %vm296, 1, 0
    %v304 = vsel %vm297, 1, 0
    %v305 = vsel %vm298, 1, 0
    %v306 = vcvt.s32.f32 %v299
    %v307 = vcvt.s32.f32 %v300
    %v308 = vcvt.s32.f32 %v301
    %v309 = vcvt.s32.f32 %v302
    %v310 = vcvt.s32.f32 %v303
    %v311 = vcvt.s32.f32 %v304
    %v312 = vcvt.s32.f32 %v305
    %v313 = vpack.c.bf16 %v307, %v306
    %v314 = vpack.c.bf16 %v309, %v308
    %v315 = vpack.c.bf16 %v311, %v310
    %v316 = vpack.c.bf16 %v312, %v312
    %v317 = vlaneseq
    %v318 = vshrl.u32 %v317, 7
    %v319 = vlaneseq
    %v320 = vshrl.u32 %v319, 7
    %v321 = vsub.s32 0, %v320
    %v322 = vrot.slane %v222, %v321
    %vm323 = vcmp.eq.s32.totalorder %v318, %v322
    %v324 = vsel %vm323, 1, 0
    %v325 = vcvt.s32.f32 %v324
    %v326 = vpack.c.bf16 %v325, %v325
    %v327 = vld [vmem:[#allocation2] sm:$0xf]
    %vm328 = vcmask 64512
    %v330 = vsel %vm328, %v267, 0
    %v333 = vsel %vm328, %v268, 0
    %v336 = vsel %vm328, %v269, 0
    %v339 = vsel %vm328, %v270, 0
    %vm341 = vcmask 1043456
    %v343 = vsel %vm341, %v327, 0
    %345 = vmatprep.subr.bf16.mxu0 0
    %346 = vmatpush1.bf16.msra.mxu0 0
    %347 = vmatprep.subr.bf16.mxu0 0
    %348 = vmatpush1.bf16.msra.mxu0 0
    %349 = vmatprep.subr.bf16.mxu0 0
    %350 = vmatpush1.bf16.msra.mxu0 0
    %351 = vmatprep.subr.bf16.mxu0 0
    %352 = vmatpush1.bf16.msra.mxu0 0
    %353 = vmatprep.subr.bf16.mxu0 0
    %354 = vmatpush1.bf16.msra.mxu0 0
    %355 = vmatprep.subr.bf16.mxu0 0
    %356 = vmatpush1.bf16.msra.mxu0 0
    %357 = vmatprep.subr.bf16.mxu0 0
    %358 = vmatpush1.bf16.msra.mxu0 0
    %359 = vmatprep.subr.bf16.mxu0 0
    %360 = vmatpush1.bf16.msra.mxu0 %v343
    %361 = vmatprep.subr.bf16.mxu0 0
    %362 = vmatpush2.bf16.msra.mxu0 0
    %363 = vmatprep.subr.bf16.mxu0 0
    %364 = vmatpush2.bf16.msra.mxu0 0
    %365 = vmatprep.subr.bf16.mxu0 0
    %366 = vmatpush2.bf16.msra.mxu0 0
    %367 = vmatprep.subr.bf16.mxu0 0
    %368 = vmatpush2.bf16.msra.mxu0 0
    %369 = vmatprep.subr.bf16.mxu0 0
    %370 = vmatpush2.bf16.msra.mxu0 0
    %371 = vmatprep.subr.bf16.mxu0 0
    %372 = vmatpush2.bf16.msra.mxu0 0
    %373 = vmatprep.subr.bf16.mxu0 0
    %374 = vmatpush2.bf16.msra.mxu0 0
    %375 = vmatprep.subr.bf16.mxu0 0
    %376 = vmatpush2.bf16.msra.mxu0 0
    %377 = vmatprep.mubr.bf16.mxu0 0
    %378 = vmatmul.mubr.bf16.gmra.mxu0 %v330
    %v379 = vpop.f32.mrf.mxu0
    %v380 = vadd.f32 0.0, %v379
    %v381 = vpop.f32.mrf.mxu0
    %v382 = vpop.f32.mrf.mxu0
    %v383 = vadd.f32 0.0, %v382
    %v384 = vpop.f32.mrf.mxu0
    %385 = vmatprep.mubr.bf16.mxu0 0
    %386 = vmatmul.mubr.bf16.gmra.mxu0 %v333
    %v387 = vpop.f32.mrf.mxu0
    %v388 = vadd.f32 0.0, %v387
    %v389 = vpop.f32.mrf.mxu0
    %v390 = vpop.f32.mrf.mxu0
    %v391 = vadd.f32 0.0, %v390
    %v392 = vpop.f32.mrf.mxu0
    %393 = vmatprep.mubr.bf16.mxu0 0
    %394 = vmatmul.mubr.bf16.gmra.mxu0 %v336
    %v395 = vpop.f32.mrf.mxu0
    %v396 = vadd.f32 0.0, %v395
    %v397 = vpop.f32.mrf.mxu0
    %v398 = vpop.f32.mrf.mxu0
    %v399 = vadd.f32 0.0, %v398
    %v400 = vpop.f32.mrf.mxu0
    %401 = vmatprep.mubr.bf16.mxu0 0
    %402 = vmatmul.mubr.bf16.gmra.mxu0 %v339
    %v403 = vpop.f32.mrf.mxu0
    %v404 = vadd.f32 0.0, %v403
    %v405 = vpop.f32.mrf.mxu0
    %v406 = vpop.f32.mrf.mxu0
    %v407 = vpop.f32.mrf.mxu0
    %408 = vdwg.mxu0
    %v409 = vld [vmem:[#allocation3] sm:$0xf]
    %v411 = vsel %vm328, %v313, 0
    %v414 = vsel %vm328, %v314, 0
    %v417 = vsel %vm328, %v315, 0
    %v420 = vsel %vm328, %v316, 0
    %v423 = vsel %vm341, %v409, 0
    %425 = vmatprep.subr.bf16.mxu0 0
    %426 = vmatpush1.bf16.msra.mxu0 0
    %427 = vmatprep.subr.bf16.mxu0 0
    %428 = vmatpush1.bf16.msra.mxu0 0
    %429 = vmatprep.subr.bf16.mxu0 0
    %430 = vmatpush1.bf16.msra.mxu0 0
    %431 = vmatprep.subr.bf16.mxu0 0
    %432 = vmatpush1.bf16.msra.mxu0 0
    %433 = vmatprep.subr.bf16.mxu0 0
    %434 = vmatpush1.bf16.msra.mxu0 0
    %435 = vmatprep.subr.bf16.mxu0 0
    %436 = vmatpush1.bf16.msra.mxu0 0
    %437 = vmatprep.subr.bf16.mxu0 0
    %438 = vmatpush1.bf16.msra.mxu0 0
    %439 = vmatprep.subr.bf16.mxu0 0
    %440 = vmatpush1.bf16.msra.mxu0 %v423
    %441 = vmatprep.subr.bf16.mxu0 0
    %442 = vmatpush2.bf16.msra.mxu0 0
    %443 = vmatprep.subr.bf16.mxu0 0
    %444 = vmatpush2.bf16.msra.mxu0 0
    %445 = vmatprep.subr.bf16.mxu0 0
    %446 = vmatpush2.bf16.msra.mxu0 0
    %447 = vmatprep.subr.bf16.mxu0 0
    %448 = vmatpush2.bf16.msra.mxu0 0
    %449 = vmatprep.subr.bf16.mxu0 0
    %450 = vmatpush2.bf16.msra.mxu0 0
    %451 = vmatprep.subr.bf16.mxu0 0
    %452 = vmatpush2.bf16.msra.mxu0 0
    %453 = vmatprep.subr.bf16.mxu0 0
    %454 = vmatpush2.bf16.msra.mxu0 0
    %455 = vmatprep.subr.bf16.mxu0 0
    %456 = vmatpush2.bf16.msra.mxu0 0
    %457 = vmatprep.mubr.bf16.mxu0 0
    %458 = vmatmul.mubr.bf16.gmra.mxu0 %v411
    %v459 = vpop.f32.mrf.mxu0
    %v460 = vadd.f32 0.0, %v459
    %v461 = vpop.f32.mrf.mxu0
    %v462 = vpop.f32.mrf.mxu0
    %v463 = vadd.f32 0.0, %v462
    %v464 = vpop.f32.mrf.mxu0
    %465 = vmatprep.mubr.bf16.mxu0 0
    %466 = vmatmul.mubr.bf16.gmra.mxu0 %v414
    %v467 = vpop.f32.mrf.mxu0
    %v468 = vadd.f32 0.0, %v467
    %v469 = vpop.f32.mrf.mxu0
    %v470 = vpop.f32.mrf.mxu0
    %v471 = vadd.f32 0.0, %v470
    %v472 = vpop.f32.mrf.mxu0
    %473 = vmatprep.mubr.bf16.mxu0 0
    %474 = vmatmul.mubr.bf16.gmra.mxu0 %v417
    %v475 = vpop.f32.mrf.mxu0
    %v476 = vadd.f32 0.0, %v475
    %v477 = vpop.f32.mrf.mxu0
    %v478 = vpop.f32.mrf.mxu0
    %v479 = vadd.f32 0.0, %v478
    %v480 = vpop.f32.mrf.mxu0
    %481 = vmatprep.mubr.bf16.mxu0 0
    %482 = vmatmul.mubr.bf16.gmra.mxu0 %v420
    %v483 = vpop.f32.mrf.mxu0
    %v484 = vadd.f32 0.0, %v483
    %v485 = vpop.f32.mrf.mxu0
    %v486 = vpop.f32.mrf.mxu0
    %v487 = vpop.f32.mrf.mxu0
    %488 = vdwg.mxu0
    %v489 = vsub.f32 %v380, %v460
    %v490 = vsub.f32 %v383, %v463
    %v491 = vsub.f32 %v388, %v468
    %v492 = vsub.f32 %v391, %v471
    %v493 = vsub.f32 %v396, %v476
    %v494 = vsub.f32 %v399, %v479
    %v495 = vsub.f32 %v404, %v484
    %v496 = vmul.f32 %v489, %v489
    %v497 = vmul.f32 %v490, %v490
    %v498 = vmul.f32 %v491, %v491
    %v499 = vmul.f32 %v492, %v492
    %v500 = vmul.f32 %v493, %v493
    %v501 = vmul.f32 %v494, %v494
    %v502 = vmul.f32 %v495, %v495
    %510 = vrot.lane.b32.xlu0 %v496, 96
    %v511 = vpop.permute.xlu0 %510
    %512 = vrot.lane.b32.xlu0 %v497, 96
    %v513 = vpop.permute.xlu0 %512
    %514 = vrot.lane.b32.xlu0 %v498, 96
    %v515 = vpop.permute.xlu0 %514
    %516 = vrot.lane.b32.xlu0 %v499, 96
    %v517 = vpop.permute.xlu0 %516
    %518 = vrot.lane.b32.xlu0 %v500, 96
    %v519 = vpop.permute.xlu0 %518
    %520 = vrot.lane.b32.xlu0 %v501, 96
    %v521 = vpop.permute.xlu0 %520
    %522 = vrot.lane.b32.xlu0 %v502, 96
    %v523 = vpop.permute.xlu0 %522
    %vm531 = vcmask 23552
    %v532 = vsel %vm531, %v511, 0.0
    %533 = vadd.xlane.f32.xlu0 %v532
    %v534 = vpop.xlane.xlu0 %533
    %v535 = vsel %vm531, %v513, 0.0
    %536 = vadd.xlane.f32.xlu0 %v535
    %v537 = vpop.xlane.xlu0 %536
    %v538 = vsel %vm531, %v515, 0.0
    %539 = vadd.xlane.f32.xlu0 %v538
    %v540 = vpop.xlane.xlu0 %539
    %v541 = vsel %vm531, %v517, 0.0
    %542 = vadd.xlane.f32.xlu0 %v541
    %v543 = vpop.xlane.xlu0 %542
    %v544 = vsel %vm531, %v519, 0.0
    %545 = vadd.xlane.f32.xlu0 %v544
    %v546 = vpop.xlane.xlu0 %545
    %v547 = vsel %vm531, %v521, 0.0
    %548 = vadd.xlane.f32.xlu0 %v547
    %v549 = vpop.xlane.xlu0 %548
    %v550 = vsel %vm531, %v523, 0.0
    %551 = vadd.xlane.f32.xlu0 %v550
    %v552 = vpop.xlane.xlu0 %551
    %v553 = vadd.f32 %v380, %v460
    %v554 = vadd.f32 %v383, %v463
    %v555 = vadd.f32 %v388, %v468
    %v556 = vadd.f32 %v391, %v471
    %v557 = vadd.f32 %v396, %v476
    %v558 = vadd.f32 %v399, %v479
    %v559 = vadd.f32 %v404, %v484
    %v560 = vld [vmem:[%s7] sm:$0x1]
    %v562 = vlaneseq
    %v563 = vshrl.u32 %v562, 7
    %v564 = vsub.s32 0, %v563
    %v565 = vrot.slane %v560, %v564
    %v567 = vmul.f32 %v534, %v565
    %v568 = vmul.f32 %v537, %v565
    %v569 = vmul.f32 %v540, %v565
    %v570 = vmul.f32 %v543, %v565
    %v571 = vmul.f32 %v546, %v565
    %v572 = vmul.f32 %v549, %v565
    %v573 = vmul.f32 %v552, %v565
    %v574 = vadd.f32 %v553, %v567
    %v575 = vadd.f32 %v554, %v568
    %v576 = vadd.f32 %v555, %v569
    %v577 = vadd.f32 %v556, %v570
    %v578 = vadd.f32 %v557, %v571
    %v579 = vadd.f32 %v558, %v572
    %v580 = vadd.f32 %v559, %v573
    %v581 = vld [vmem:[%s8] sm:$0x1]
    %v583 = vlaneseq
    %v584 = vshrl.u32 %v583, 7
    %v585 = vsub.s32 0, %v584
    %v586 = vrot.slane %v581, %v585
    %v588 = vadd.f32 %v574, %v586
    %v589 = vadd.f32 %v575, %v586
    %v590 = vadd.f32 %v576, %v586
    %v591 = vadd.f32 %v577, %v586
    %v592 = vadd.f32 %v578, %v586
    %v593 = vadd.f32 %v579, %v586
    %v594 = vadd.f32 %v580, %v586
    %v595 = vmax.f32 %v588, 0.0
    %v596 = vmax.f32 %v589, 0.0
    %v597 = vmax.f32 %v590, 0.0
    %v598 = vmax.f32 %v591, 0.0
    %v599 = vmax.f32 %v592, 0.0
    %v600 = vmax.f32 %v593, 0.0
    %v601 = vmax.f32 %v594, 0.0
    %v602 = vpack.c.bf16 %v596, %v595
    %v603 = vpack.c.bf16 %v598, %v597
    %v604 = vpack.c.bf16 %v600, %v599
    %v605 = vpack.c.bf16 %v601, %v601
    %v606 = vld [vmem:[%s9] sm:$0xf]
    %v607 = vld [vmem:[%s9 + $0x4] sm:$0xf]
    %v608 = vld [vmem:[%s9 + $0x8] sm:$0xf]
    %v609 = vld [vmem:[%s9 + $0xc] sm:$0xf]
    %v610 = vld [vmem:[%s10] sm:$0x1]
    %v612 = vlaneseq
    %v613 = vshrl.u32 %v612, 7
    %v614 = vsub.s32 0, %v613
    %v615 = vrot.slane %v610, %v614
    %v621 = vunpack.c.l.b16 %v606
    %v622 = vunpack.c.l.b16 %v607
    %v623 = vunpack.c.l.b16 %v608
    %v624 = vunpack.c.l.b16 %v609
    %v625 = vpack.c.b16 %v622, %v621
    %v626 = vpack.c.b16 %v624, %v623
    %vm629 = vcmask 261120
    %v631 = vsel %vm629, %v602, 0
    %v634 = vsel %vm629, %v603, 0
    %v637 = vsel %vm629, %v604, 0
    %v640 = vsel %vm629, %v605, 0
    %642 = vmatprep.subr.bf16.mxu0 0
    %643 = vmatpush1.bf16.msra.mxu0 0
    %644 = vmatprep.subr.bf16.mxu0 0
    %645 = vmatpush1.bf16.msra.mxu0 0
    %646 = vmatprep.subr.bf16.mxu0 0
    %647 = vmatpush1.bf16.msra.mxu0 0
    %648 = vmatprep.subr.bf16.mxu0 0
    %649 = vmatpush1.bf16.msra.mxu0 0
    %650 = vmatprep.subr.bf16.mxu0 0
    %651 = vmatpush1.bf16.msra.mxu0 0
    %652 = vmatprep.subr.bf16.mxu0 0
    %653 = vmatpush1.bf16.msra.mxu0 0
    %654 = vmatprep.subr.bf16.mxu0 0
    %655 = vmatpush1.bf16.msra.mxu0 %v626
    %656 = vmatprep.subr.bf16.mxu0 0
    %657 = vmatpush1.bf16.msra.mxu0 %v625
    %658 = vmatprep.subr.bf16.mxu0 0
    %659 = vmatpush2.bf16.msra.mxu0 0
    %660 = vmatprep.subr.bf16.mxu0 0
    %661 = vmatpush2.bf16.msra.mxu0 0
    %662 = vmatprep.subr.bf16.mxu0 0
    %663 = vmatpush2.bf16.msra.mxu0 0
    %664 = vmatprep.subr.bf16.mxu0 0
    %665 = vmatpush2.bf16.msra.mxu0 0
    %666 = vmatprep.subr.bf16.mxu0 0
    %667 = vmatpush2.bf16.msra.mxu0 0
    %668 = vmatprep.subr.bf16.mxu0 0
    %669 = vmatpush2.bf16.msra.mxu0 0
    %670 = vmatprep.subr.bf16.mxu0 0
    %671 = vmatpush2.bf16.msra.mxu0 0
    %672 = vmatprep.subr.bf16.mxu0 0
    %673 = vmatpush2.bf16.msra.mxu0 0
    %674 = vmatprep.mubr.bf16.mxu0 0
    %675 = vmatmul.mubr.bf16.gmra.mxu0 %v631
    %v676 = vpop.f32.mrf.mxu0
    %v677 = vadd.f32 %v615, %v676
    %v678 = vpop.f32.mrf.mxu0
    %v679 = vpop.f32.mrf.mxu0
    %v680 = vadd.f32 %v615, %v679
    %v681 = vpop.f32.mrf.mxu0
    %682 = vmatprep.mubr.bf16.mxu0 0
    %683 = vmatmul.mubr.bf16.gmra.mxu0 %v634
    %v684 = vpop.f32.mrf.mxu0
    %v685 = vadd.f32 %v615, %v684
    %v686 = vpop.f32.mrf.mxu0
    %v687 = vpop.f32.mrf.mxu0
    %v688 = vadd.f32 %v615, %v687
    %v689 = vpop.f32.mrf.mxu0
    %690 = vmatprep.mubr.bf16.mxu0 0
    %691 = vmatmul.mubr.bf16.gmra.mxu0 %v637
    %v692 = vpop.f32.mrf.mxu0
    %v693 = vadd.f32 %v615, %v692
    %v694 = vpop.f32.mrf.mxu0
    %v695 = vpop.f32.mrf.mxu0
    %v696 = vadd.f32 %v615, %v695
    %v697 = vpop.f32.mrf.mxu0
    %698 = vmatprep.mubr.bf16.mxu0 0
    %699 = vmatmul.mubr.bf16.gmra.mxu0 %v640
    %v700 = vpop.f32.mrf.mxu0
    %v701 = vadd.f32 %v615, %v700
    %v702 = vpop.f32.mrf.mxu0
    %v703 = vpop.f32.mrf.mxu0
    %v704 = vpop.f32.mrf.mxu0
    %705 = vdwg.mxu0
    %v706 = vmax.f32 %v677, 0.0
    %v707 = vmax.f32 %v680, 0.0
    %v708 = vmax.f32 %v685, 0.0
    %v709 = vmax.f32 %v688, 0.0
    %v710 = vmax.f32 %v693, 0.0
    %v711 = vmax.f32 %v696, 0.0
    %v712 = vmax.f32 %v701, 0.0
    %v713 = vpack.c.bf16 %v707, %v706
    %v714 = vpack.c.bf16 %v709, %v708
    %v715 = vpack.c.bf16 %v711, %v710
    %v716 = vpack.c.bf16 %v712, %v712
    %v717 = vld [vmem:[%s11] sm:$0xf]
    %v718 = vld [vmem:[%s11 + $0x4] sm:$0xf]
    %v719 = vld [vmem:[%s11 + $0x8] sm:$0xf]
    %v720 = vld [vmem:[%s11 + $0xc] sm:$0xf]
    %v721 = vld [vmem:[%s12] sm:$0x1]
    %v723 = vlaneseq
    %v724 = vshrl.u32 %v723, 7
    %v725 = vsub.s32 0, %v724
    %v726 = vrot.slane %v721, %v725
    %v732 = vunpack.c.l.b16 %v717
    %v733 = vunpack.c.l.b16 %v718
    %v734 = vunpack.c.l.b16 %v719
    %v735 = vunpack.c.l.b16 %v720
    %v736 = vpack.c.b16 %v733, %v732
    %v737 = vpack.c.b16 %v735, %v734
    %v741 = vsel %vm629, %v713, 0
    %v744 = vsel %vm629, %v714, 0
    %v747 = vsel %vm629, %v715, 0
    %v750 = vsel %vm629, %v716, 0
    %752 = vmatprep.subr.bf16.mxu0 0
    %753 = vmatpush1.bf16.msra.mxu0 0
    %754 = vmatprep.subr.bf16.mxu0 0
    %755 = vmatpush1.bf16.msra.mxu0 0
    %756 = vmatprep.subr.bf16.mxu0 0
    %757 = vmatpush1.bf16.msra.mxu0 0
    %758 = vmatprep.subr.bf16.mxu0 0
    %759 = vmatpush1.bf16.msra.mxu0 0
    %760 = vmatprep.subr.bf16.mxu0 0
    %761 = vmatpush1.bf16.msra.mxu0 0
    %762 = vmatprep.subr.bf16.mxu0 0
    %763 = vmatpush1.bf16.msra.mxu0 0
    %764 = vmatprep.subr.bf16.mxu0 0
    %765 = vmatpush1.bf16.msra.mxu0 %v737
    %766 = vmatprep.subr.bf16.mxu0 0
    %767 = vmatpush1.bf16.msra.mxu0 %v736
    %768 = vmatprep.subr.bf16.mxu0 0
    %769 = vmatpush2.bf16.msra.mxu0 0
    %770 = vmatprep.subr.bf16.mxu0 0
    %771 = vmatpush2.bf16.msra.mxu0 0
    %772 = vmatprep.subr.bf16.mxu0 0
    %773 = vmatpush2.bf16.msra.mxu0 0
    %774 = vmatprep.subr.bf16.mxu0 0
    %775 = vmatpush2.bf16.msra.mxu0 0
    %776 = vmatprep.subr.bf16.mxu0 0
    %777 = vmatpush2.bf16.msra.mxu0 0
    %778 = vmatprep.subr.bf16.mxu0 0
    %779 = vmatpush2.bf16.msra.mxu0 0
    %780 = vmatprep.subr.bf16.mxu0 0
    %781 = vmatpush2.bf16.msra.mxu0 0
    %782 = vmatprep.subr.bf16.mxu0 0
    %783 = vmatpush2.bf16.msra.mxu0 0
    %784 = vmatprep.mubr.bf16.mxu0 0
    %785 = vmatmul.mubr.bf16.gmra.mxu0 %v741
    %v786 = vpop.f32.mrf.mxu0
    %v787 = vadd.f32 %v726, %v786
    %v788 = vpop.f32.mrf.mxu0
    %v789 = vpop.f32.mrf.mxu0
    %v790 = vadd.f32 %v726, %v789
    %v791 = vpop.f32.mrf.mxu0
    %792 = vmatprep.mubr.bf16.mxu0 0
    %793 = vmatmul.mubr.bf16.gmra.mxu0 %v744
    %v794 = vpop.f32.mrf.mxu0
    %v795 = vadd.f32 %v726, %v794
    %v796 = vpop.f32.mrf.mxu0
    %v797 = vpop.f32.mrf.mxu0
    %v798 = vadd.f32 %v726, %v797
    %v799 = vpop.f32.mrf.mxu0
    %800 = vmatprep.mubr.bf16.mxu0 0
    %801 = vmatmul.mubr.bf16.gmra.mxu0 %v747
    %v802 = vpop.f32.mrf.mxu0
    %v803 = vadd.f32 %v726, %v802
    %v804 = vpop.f32.mrf.mxu0
    %v805 = vpop.f32.mrf.mxu0
    %v806 = vadd.f32 %v726, %v805
    %v807 = vpop.f32.mrf.mxu0
    %808 = vmatprep.mubr.bf16.mxu0 0
    %809 = vmatmul.mubr.bf16.gmra.mxu0 %v750
    %v810 = vpop.f32.mrf.mxu0
    %v811 = vadd.f32 %v726, %v810
    %v812 = vpop.f32.mrf.mxu0
    %v813 = vpop.f32.mrf.mxu0
    %v814 = vpop.f32.mrf.mxu0
    %815 = vdwg.mxu0
    %v816 = vmax.f32 %v787, 0.0
    %v817 = vmax.f32 %v790, 0.0
    %v818 = vmax.f32 %v795, 0.0
    %v819 = vmax.f32 %v798, 0.0
    %v820 = vmax.f32 %v803, 0.0
    %v821 = vmax.f32 %v806, 0.0
    %v822 = vmax.f32 %v811, 0.0
    %v823 = vld [vmem:[%s13] sm:$0x1]
    %v825 = vlaneseq
    %v826 = vshrl.u32 %v825, 7
    %v827 = vsub.s32 0, %v826
    %v828 = vrot.slane %v823, %v827
    %v830 = vmul.f32 %v816, %v828
    %v831 = vmul.f32 %v817, %v828
    %v832 = vmul.f32 %v818, %v828
    %v833 = vmul.f32 %v819, %v828
    %v834 = vmul.f32 %v820, %v828
    %v835 = vmul.f32 %v821, %v828
    %v836 = vmul.f32 %v822, %v828
    %v837 = vsel %vm629, %v830, 0.0
    %838 = vadd.xlane.f32.xlu0 %v837
    %v839 = vpop.xlane.xlu0 %838
    %v840 = vsel %vm629, %v831, 0.0
    %841 = vadd.xlane.f32.xlu0 %v840
    %v842 = vpop.xlane.xlu0 %841
    %v843 = vsel %vm629, %v832, 0.0
    %844 = vadd.xlane.f32.xlu0 %v843
    %v845 = vpop.xlane.xlu0 %844
    %v846 = vsel %vm629, %v833, 0.0
    %847 = vadd.xlane.f32.xlu0 %v846
    %v848 = vpop.xlane.xlu0 %847
    %v849 = vsel %vm629, %v834, 0.0
    %850 = vadd.xlane.f32.xlu0 %v849
    %v851 = vpop.xlane.xlu0 %850
    %v852 = vsel %vm629, %v835, 0.0
    %853 = vadd.xlane.f32.xlu0 %v852
    %v854 = vpop.xlane.xlu0 %853
    %v855 = vsel %vm629, %v836, 0.0
    %856 = vadd.xlane.f32.xlu0 %v855
    %v857 = vpop.xlane.xlu0 %856
    %v858 = vmul.f32 %v489, %v839
    %v859 = vmul.f32 %v490, %v842
    %v860 = vmul.f32 %v491, %v845
    %v861 = vmul.f32 %v492, %v848
    %v862 = vmul.f32 %v493, %v851
    %v863 = vmul.f32 %v494, %v854
    %v864 = vmul.f32 %v495, %v857
    %v865 = vpack.c.bf16 %v859, %v858
    %v866 = vpack.c.bf16 %v861, %v860
    %v867 = vpack.c.bf16 %v863, %v862
    %v868 = vpack.c.bf16 %v864, %v864
    %v870 = vsel %vm629, %v713, %v865
    %v872 = vsel %vm629, %v714, %v866
    %v874 = vsel %vm629, %v715, %v867
    %v876 = vsel %vm629, %v716, %v868
    %vm877 = vcmask 285696
    %v879 = vsel %vm877, %v870, 1065369472
    %v881 = vsel %vm877, %v872, 1065369472
    %v883 = vsel %vm877, %v874, 1065369472
    %v885 = vsel %vm877, %v876, 1065369472
    %v886 = vld [vmem:[#allocation4] sm:$0xff]
    %vm887 = vcmask 457728
    %v889 = vsel %vm887, %v326, 0
    %v891 = vsel %vm341, %v885, 0
    %893 = vmatprep.subr.bf16.mxu0 0
    %894 = vmatpush1.bf16.msra.mxu0 0
    %895 = vmatprep.subr.bf16.mxu0 0
    %896 = vmatpush1.bf16.msra.mxu0 0
    %897 = vmatprep.subr.bf16.mxu0 0
    %898 = vmatpush1.bf16.msra.mxu0 0
    %899 = vmatprep.subr.bf16.mxu0 0
    %900 = vmatpush1.bf16.msra.mxu0 0
    %901 = vmatprep.subr.bf16.mxu0 0
    %902 = vmatpush1.bf16.msra.mxu0 %v891
    %903 = vmatprep.subr.bf16.mxu0 0
    %904 = vmatpush1.bf16.msra.mxu0 %v883
    %905 = vmatprep.subr.bf16.mxu0 0
    %906 = vmatpush1.bf16.msra.mxu0 %v881
    %907 = vmatprep.subr.bf16.mxu0 0
    %908 = vmatpush1.bf16.msra.mxu0 %v879
    %909 = vmatprep.subr.bf16.mxu0 0
    %910 = vmatpush2.bf16.msra.mxu0 0
    %911 = vmatprep.subr.bf16.mxu0 0
    %912 = vmatpush2.bf16.msra.mxu0 0
    %913 = vmatprep.subr.bf16.mxu0 0
    %914 = vmatpush2.bf16.msra.mxu0 0
    %915 = vmatprep.subr.bf16.mxu0 0
    %916 = vmatpush2.bf16.msra.mxu0 0
    %917 = vmatprep.subr.bf16.mxu0 0
    %918 = vmatpush2.bf16.msra.mxu0 0
    %919 = vmatprep.subr.bf16.mxu0 0
    %920 = vmatpush2.bf16.msra.mxu0 0
    %921 = vmatprep.subr.bf16.mxu0 0
    %922 = vmatpush2.bf16.msra.mxu0 0
    %923 = vmatprep.subr.bf16.mxu0 0
    %924 = vmatpush2.bf16.msra.mxu0 0
    %925 = vmatprep.mubr.bf16.mxu0 0
    %926 = vmatmul.mubr.bf16.gmra.mxu0 %v889
    %v927 = vpop.f32.mrf.mxu0
    %v928 = vadd.f32 0.0, %v927
    %v929 = vpop.f32.mrf.mxu0
    %v930 = vpop.f32.mrf.mxu0
    %v931 = vpop.f32.mrf.mxu0
    %932 = vdwg.mxu0
    %v933 = vadd.f32 %v886, %v928
    %vm934 = vcmask 293888
    %935 = vst.msk [vmem:[#allocation4] sm:$0xff] %vm934, %v933
    // Predicated region
    $region82: #{tpu_custom_call.1} parent=1 // pred_check
      %p936 = pneg %p67
    $region83: #{tpu_custom_call.1} parent=1 // pred_check_branch
      %938 = sbr.rel (%p936) target = $region85
    $region84: #{tpu_custom_call.1} parent=1 // pred_region
      %v939 = vld [vmem:[#allocation4] sm:$0xff]
      %v940 = vmax.f32 %v939, 1.0
      %v941 = vld [vmem:[%s4] sm:$0xff]
      %943 = vset.pattern.permute.xlu0 35
      %944 = vperm.xlu0 %943, %v940
      %v945 = vpop.permute.xlu0 %944
      %v947 = vrcp.pop %v945
      %v948 = vmul.f32 %v939, %v947
      %950 = vrot.lane.b32.xlu0 %v948, 96
      %v951 = vpop.permute.xlu0 %950
      %v953 = vadd.f32 %v941, %v951
      %954 = vst.msk [vmem:[%s20] sm:$0xff] %vm531, %v953
      %v955 = vld [vmem:[%s3] sm:$0xff]
      %v956 = vpack.c.bf16 %v955, %v955
      %v957 = vld [vmem:[%s14] sm:$0xf]
      %v958 = vld [vmem:[%s14 + $0x4] sm:$0xf]
      %v959 = vld [vmem:[%s14 + $0x8] sm:$0xf]
      %v960 = vld [vmem:[%s14 + $0xc] sm:$0xf]
      %v961 = vpack.c.bf16 %v939, %v939
      %v962 = vld [vmem:[%s15] sm:$0xf]
      %v963 = vld [vmem:[%s15 + $0x4] sm:$0xf]
      %v964 = vld [vmem:[%s15 + $0x8] sm:$0xf]
      %v965 = vld [vmem:[%s15 + $0xc] sm:$0xf]
      %v970 = vunpack.c.l.b16 %v962
      %v971 = vunpack.c.l.b16 %v963
      %v972 = vunpack.c.l.b16 %v964
      %v973 = vunpack.c.l.b16 %v965
      %v974 = vpack.c.b16 %v971, %v970
      %v975 = vpack.c.b16 %v973, %v972
      %v979 = vsel %vm629, %v961, 0
      %981 = vmatprep.subr.bf16.mxu0 0
      %982 = vmatpush1.bf16.msra.mxu0 0
      %983 = vmatprep.subr.bf16.mxu0 0
      %984 = vmatpush1.bf16.msra.mxu0 0
      %985 = vmatprep.subr.bf16.mxu0 0
      %986 = vmatpush1.bf16.msra.mxu0 0
      %987 = vmatprep.subr.bf16.mxu0 0
      %988 = vmatpush1.bf16.msra.mxu0 0
      %989 = vmatprep.subr.bf16.mxu0 0
      %990 = vmatpush1.bf16.msra.mxu0 0
      %991 = vmatprep.subr.bf16.mxu0 0
      %992 = vmatpush1.bf16.msra.mxu0 0
      %993 = vmatprep.subr.bf16.mxu0 0
      %994 = vmatpush1.bf16.msra.mxu0 %v975
      %995 = vmatprep.subr.bf16.mxu0 0
      %996 = vmatpush1.bf16.msra.mxu0 %v974
      %997 = vmatprep.subr.bf16.mxu0 0
      %998 = vmatpush2.bf16.msra.mxu0 0
      %999 = vmatprep.subr.bf16.mxu0 0
      %1000 = vmatpush2.bf16.msra.mxu0 0
      %1001 = vmatprep.subr.bf16.mxu0 0
      %1002 = vmatpush2.bf16.msra.mxu0 0
      %1003 = vmatprep.subr.bf16.mxu0 0
      %1004 = vmatpush2.bf16.msra.mxu0 0
      %1005 = vmatprep.subr.bf16.mxu0 0
      %1006 = vmatpush2.bf16.msra.mxu0 0
      %1007 = vmatprep.subr.bf16.mxu0 0
      %1008 = vmatpush2.bf16.msra.mxu0 0
      %1009 = vmatprep.subr.bf16.mxu0 0
      %1010 = vmatpush2.bf16.msra.mxu0 0
      %1011 = vmatprep.subr.bf16.mxu0 0
      %1012 = vmatpush2.bf16.msra.mxu0 0
      %1013 = vmatprep.mubr.bf16.mxu0 0
      %1014 = vmatmul.mubr.bf16.gmra.mxu0 %v979
      %v1015 = vpop.f32.mrf.mxu0
      %v1016 = vadd.f32 0.0, %v1015
      %v1017 = vpop.f32.mrf.mxu0
      %v1018 = vpop.f32.mrf.mxu0
      %v1019 = vpop.f32.mrf.mxu0
      %1020 = vdwg.mxu0
      %v1025 = vunpack.c.l.b16 %v957
      %v1026 = vunpack.c.l.b16 %v958
      %v1027 = vunpack.c.l.b16 %v959
      %v1028 = vunpack.c.l.b16 %v960
      %v1029 = vpack.c.b16 %v1026, %v1025
      %v1030 = vpack.c.b16 %v1028, %v1027
      %v1034 = vsel %vm629, %v956, 0
      %1036 = vmatprep.subr.bf16.mxu0 0
      %1037 = vmatpush1.bf16.msra.mxu0 0
      %1038 = vmatprep.subr.bf16.mxu0 0
      %1039 = vmatpush1.bf16.msra.mxu0 0
      %1040 = vmatprep.subr.bf16.mxu0 0
      %1041 = vmatpush1.bf16.msra.mxu0 0
      %1042 = vmatprep.subr.bf16.mxu0 0
      %1043 = vmatpush1.bf16.msra.mxu0 0
      %1044 = vmatprep.subr.bf16.mxu0 0
      %1045 = vmatpush1.bf16.msra.mxu0 0
      %1046 = vmatprep.subr.bf16.mxu0 0
      %1047 = vmatpush1.bf16.msra.mxu0 0
      %1048 = vmatprep.subr.bf16.mxu0 0
      %1049 = vmatpush1.bf16.msra.mxu0 %v1030
      %1050 = vmatprep.subr.bf16.mxu0 0
      %1051 = vmatpush1.bf16.msra.mxu0 %v1029
      %1052 = vmatprep.subr.bf16.mxu0 0
      %1053 = vmatpush2.bf16.msra.mxu0 0
      %1054 = vmatprep.subr.bf16.mxu0 0
      %1055 = vmatpush2.bf16.msra.mxu0 0
      %1056 = vmatprep.subr.bf16.mxu0 0
      %1057 = vmatpush2.bf16.msra.mxu0 0
      %1058 = vmatprep.subr.bf16.mxu0 0
      %1059 = vmatpush2.bf16.msra.mxu0 0
      %1060 = vmatprep.subr.bf16.mxu0 0
      %1061 = vmatpush2.bf16.msra.mxu0 0
      %1062 = vmatprep.subr.bf16.mxu0 0
      %1063 = vmatpush2.bf16.msra.mxu0 0
      %1064 = vmatprep.subr.bf16.mxu0 0
      %1065 = vmatpush2.bf16.msra.mxu0 0
      %1066 = vmatprep.subr.bf16.mxu0 0
      %1067 = vmatpush2.bf16.msra.mxu0 0
      %1068 = vmatprep.mubr.bf16.mxu0 0
      %1069 = vmatmul.mubr.bf16.gmra.mxu0 %v1034
      %v1070 = vpop.f32.mrf.mxu0
      %v1071 = vadd.f32 %v1016, %v1070
      %v1072 = vpop.f32.mrf.mxu0
      %v1073 = vpop.f32.mrf.mxu0
      %v1074 = vpop.f32.mrf.mxu0
      %1075 = vdwg.mxu0
      %v1076 = vld [vmem:[%s16] sm:$0x1]
      %v1078 = vlaneseq
      %v1079 = vshrl.u32 %v1078, 7
      %v1080 = vsub.s32 0, %v1079
      %v1081 = vrot.slane %v1076, %v1080
      %v1083 = vadd.f32 %v1071, %v1081
      %v1084 = vmax.f32 %v1083, 0.0
      %v1085 = vpack.c.bf16 %v1084, %v1084
      %v1086 = vld [vmem:[%s17] sm:$0xf]
      %v1087 = vld [vmem:[%s17 + $0x4] sm:$0xf]
      %v1088 = vld [vmem:[%s17 + $0x8] sm:$0xf]
      %v1089 = vld [vmem:[%s17 + $0xc] sm:$0xf]
      %v1094 = vunpack.c.l.b16 %v1086
      %v1095 = vunpack.c.l.b16 %v1087
      %v1096 = vunpack.c.l.b16 %v1088
      %v1097 = vunpack.c.l.b16 %v1089
      %v1098 = vpack.c.b16 %v1095, %v1094
      %v1099 = vpack.c.b16 %v1097, %v1096
      %v1103 = vsel %vm629, %v1085, 0
      %1105 = vmatprep.subr.bf16.mxu0 0
      %1106 = vmatpush1.bf16.msra.mxu0 0
      %1107 = vmatprep.subr.bf16.mxu0 0
      %1108 = vmatpush1.bf16.msra.mxu0 0
      %1109 = vmatprep.subr.bf16.mxu0 0
      %1110 = vmatpush1.bf16.msra.mxu0 0
      %1111 = vmatprep.subr.bf16.mxu0 0
      %1112 = vmatpush1.bf16.msra.mxu0 0
      %1113 = vmatprep.subr.bf16.mxu0 0
      %1114 = vmatpush1.bf16.msra.mxu0 0
      %1115 = vmatprep.subr.bf16.mxu0 0
      %1116 = vmatpush1.bf16.msra.mxu0 0
      %1117 = vmatprep.subr.bf16.mxu0 0
      %1118 = vmatpush1.bf16.msra.mxu0 %v1099
      %1119 = vmatprep.subr.bf16.mxu0 0
      %1120 = vmatpush1.bf16.msra.mxu0 %v1098
      %1121 = vmatprep.subr.bf16.mxu0 0
      %1122 = vmatpush2.bf16.msra.mxu0 0
      %1123 = vmatprep.subr.bf16.mxu0 0
      %1124 = vmatpush2.bf16.msra.mxu0 0
      %1125 = vmatprep.subr.bf16.mxu0 0
      %1126 = vmatpush2.bf16.msra.mxu0 0
      %1127 = vmatprep.subr.bf16.mxu0 0
      %1128 = vmatpush2.bf16.msra.mxu0 0
      %1129 = vmatprep.subr.bf16.mxu0 0
      %1130 = vmatpush2.bf16.msra.mxu0 0
      %1131 = vmatprep.subr.bf16.mxu0 0
      %1132 = vmatpush2.bf16.msra.mxu0 0
      %1133 = vmatprep.subr.bf16.mxu0 0
      %1134 = vmatpush2.bf16.msra.mxu0 0
      %1135 = vmatprep.subr.bf16.mxu0 0
      %1136 = vmatpush2.bf16.msra.mxu0 0
      %1137 = vmatprep.mubr.bf16.mxu0 0
      %1138 = vmatmul.mubr.bf16.gmra.mxu0 %v1103
      %v1139 = vpop.f32.mrf.mxu0
      %v1140 = vadd.f32 0.0, %v1139
      %v1141 = vpop.f32.mrf.mxu0
      %v1142 = vpop.f32.mrf.mxu0
      %v1143 = vpop.f32.mrf.mxu0
      %1144 = vdwg.mxu0
      %v1145 = vadd.f32 %v955, %v1140
      %v1146 = vld [vmem:[%s18] sm:$0x1]
      %v1148 = vlaneseq
      %v1149 = vshrl.u32 %v1148, 7
      %v1150 = vsub.s32 0, %v1149
      %v1151 = vrot.slane %v1146, %v1150
      %v1153 = vadd.f32 %v1145, %v1151
      %1154 = vst.msk [vmem:[#allocation5] sm:$0xff] %vm629, %v1153
    $region85: #{tpu_custom_call.1} parent=1 // pred_fallthru
      _
    // Predicated region
    $region86: #{tpu_custom_call.1} parent=1 // pred_check
      _
    $region87: #{tpu_custom_call.1} parent=1 // pred_check_branch
      %1156 = sbr.rel (0) target = $region89
    $region88: #{tpu_custom_call.1} parent=1 // pred_region
      %s1158 = ssub.s32 128, 128
      %1159 = vsyncadd [#allocation6], %s1158
      %s1161 = sshll.u32 [#allocation5], 4
      %s1162 = int_to_ptr.vmem [resolvable:$true] %s1161
      %1164 = dma.vmem_to_hbm [thread:$0]  %s1162, 128, %s19, [#allocation6]
    $region89: #{tpu_custom_call.1} parent=1 // pred_fallthru
      _
    // Predicated region
    $region90: #{tpu_custom_call.1} parent=1 // pred_check
      _
    $region91: #{tpu_custom_call.1} parent=1 // pred_check_branch
      %1166 = sbr.rel (0) target = $region93
    $region92: #{tpu_custom_call.1} parent=1 // pred_region
      _
    $region93: #{tpu_custom_call.1} parent=1 // pred_fallthru
      _
    // Predicated region
    $region94: #{tpu_custom_call.1} parent=1 // pred_check
      _
    $region95: #{tpu_custom_call.1} parent=1 // pred_check_branch
      %1168 = sbr.rel (0) target = $region97
    $region96: #{tpu_custom_call.1} parent=1 // pred_region
      %1169 = dma.done [#allocation6], 128
    $region97: #{tpu_custom_call.1} parent=1 // pred_fallthru
      _
    // Predicated region
    $region98: #{tpu_custom_call.1} parent=1 // pred_check
      _
    $region99: #{tpu_custom_call.1} parent=1 // pred_check_branch
      %1171 = sbr.rel (0) target = $region101
    $region100: #{tpu_custom_call.1} parent=1 // pred_region
      _
    $region101: #{tpu_custom_call.1} parent=1 // pred_fallthru
      _
    %1172 = vsyncpa [#allocation6], 1

</llo_original>
